<compile_context>
chip_gen: v6e
topology: v6e:2x2x1
jax: 0.10.0
libtpu: 0.0.40
codegen_flags: <defaults>
</compile_context>

<pallas_src>
import functools

import jax
import jax.numpy as jnp
from jax import lax
from jax.experimental import pallas as pl
from jax.experimental.pallas import tpu as pltpu

NSP = 9          # 3x3 superpixel candidates per pixel
EPS = 1e-10
LANE = 128


def _round_up(x, m):
    return ((x + m - 1) // m) * m


def _vmem_limit_bytes():
    """Scoped VMEM budget: half of physical, capped at 64 MiB (v5e/v6e 128 MiB -> 64 MiB,
    v7x 64 MiB -> 32 MiB, unknown -> 32 MiB)."""
    cap = 64 * 1024 * 1024
    try:
        info = pltpu.get_tpu_info()
        cap = int(getattr(info, "vmem_capacity_bytes", cap))
    except Exception:
        pass
    return int(max(16 * 1024 * 1024, min(cap // 2, 64 * 1024 * 1024)))


def _choose_tiling(N, B, HD, w_itemsize, vmem_limit_bytes, lane_chunk):
    """Pick (lane tile NT, in-kernel lane chunk LC, padded N) for the pallas grid."""
    lc = min(_round_up(lane_chunk, LANE), _round_up(N, LANE))
    # Double-buffered, sublane-padded (9->16 per group) VMEM bytes per lane of tile:
    #   attn + out: 2 * HD * 16 rows * 4 B ; W: 9*16 rows ; pi: 16 rows (w_itemsize each).
    per_lane = 2 * (2 * HD * 16 * 4 + (NSP + 1) * 16 * w_itemsize)
    nt_cap = (int(vmem_limit_bytes * 0.6) // per_lane) // lc * lc
    hard_cap = max(lc, (8192 // lc) * lc)
    nt_cap = max(lc, min(nt_cap, hard_cap))

    need = _round_up(N, lc)
    n_chunks_total = need // lc
    # v7x has 2 TensorCores sharing the 'parallel' grid axes: keep >= 2 N-tiles if B == 1.
    min_tiles = 2 if (B == 1 and n_chunks_total >= 2) else 1
    n_tiles = max(min_tiles, pl.cdiv(need, nt_cap))
    nt = pl.cdiv(n_chunks_total, n_tiles) * lc
    n_tiles = pl.cdiv(need, nt)
    return nt, lc, n_tiles * nt


# ---------------------------------------------------------------------------
# Pallas kernel: one (batch, N-tile) per grid step; all heads handled inside.
# ---------------------------------------------------------------------------
def attn_reweight_kernel(attn_ref, w_ref, pi_ref, out_ref, *, lc):
    # attn_ref: (HD, K, NT)   logits, lane-dense in N
    # w_ref:    (NSP, K, NT)  matched neighbor probabilities P(L_j = s)  (f32 or bf16)
    # pi_ref:   (NSP, NT)     pixel-own candidate probabilities P(L_i = s)
    # out_ref:  (HD, K, NT)
    HD, K, NT = attn_ref.shape

    # Static lane-chunk loop: bounds vreg live ranges while the DMA tile stays full-NT.
    for c0 in range(0, NT, lc):
        lanes = pl.ds(c0, lc)
        pi_c = pi_ref[:, lanes].astype(jnp.float32)            # (NSP, lc), cast once/chunk

        def head_body(h, carry):
            a = attn_ref[h, :, lanes].astype(jnp.float32)      # (K, lc)
            cmax = jnp.max(a, axis=0, keepdims=True)           # (1, lc)  XLU reduce
            e = jnp.exp(a - cmax)                              # (K, lc)  EUP
            acc = jnp.zeros_like(e)                            # (K, lc)
            for s in range(NSP):
                w_s = w_ref[s, :, lanes].astype(jnp.float32)   # (K, lc)
                num_s = w_s * e                                # W[s,k]*e_k
                den_s = EPS + jnp.sum(num_s, axis=0, keepdims=True)   # (1, lc)
                # EUP approx reciprocal + one Newton step ~= f32-exact; keeps the divide
                # off the VALU critical path.
                r = pl.reciprocal(den_s, approx=True)
                r = r * (2.0 - den_s * r)
                pi_s = pi_c[s:s + 1, :]                        # (1, lc)
                # out_k += (pi_s / den_s) * W[s,k] * e_k   (A never materialized)
                acc = acc + (pi_s * r) * num_s
            out_ref[h, :, lanes] = acc.astype(out_ref.dtype)
            return carry

        lax.fori_loop(0, HD, head_body, 0, unroll=True)


def attn_reweight_pallas(attn_t, w_t, pi_t, *, lane_chunk=512):
    """attn_t (B,HD,K,N), w_t (B,NSP,K,N), pi_t (B,NSP,N) -> (B,HD,K,N)."""
    B, HD, K, N = attn_t.shape
    assert w_t.shape == (B, NSP, K, N) and pi_t.shape == (B, NSP, N)

    vmem_limit = _vmem_limit_bytes()
    w_itemsize = jnp.dtype(w_t.dtype).itemsize
    NT, LC, Np = _choose_tiling(N, B, HD, w_itemsize, vmem_limit, lane_chunk)

    if Np != N:
        pad = Np - N
        # Padding is benign: w=0, pi=0 -> den=EPS, out=0 in the pad region (sliced off).
        attn_t = jnp.pad(attn_t, ((0, 0), (0, 0), (0, 0), (0, pad)))
        w_t = jnp.pad(w_t, ((0, 0), (0, 0), (0, 0), (0, pad)))
        pi_t = jnp.pad(pi_t, ((0, 0), (0, 0), (0, pad)))

    grid = (B, Np // NT)
    kernel = functools.partial(attn_reweight_kernel, lc=LC)
    out = pl.pallas_call(
        kernel,
        out_shape=jax.ShapeDtypeStruct((B, HD, K, Np), attn_t.dtype),
        grid_spec=pltpu.PrefetchScalarGridSpec(
            num_scalar_prefetch=0,
            grid=grid,
            in_specs=[
                # Batch axis squeezed out of the kernel refs (block dim = None).
                pl.BlockSpec((None, HD, K, NT), lambda b, n: (b, 0, 0, n)),
                pl.BlockSpec((None, NSP, K, NT), lambda b, n: (b, 0, 0, n)),
                pl.BlockSpec((None, NSP, NT), lambda b, n: (b, 0, n)),
            ],
            out_specs=pl.BlockSpec((None, HD, K, NT), lambda b, n: (b, 0, 0, n)),
        ),
        compiler_params=pltpu.CompilerParams(
            dimension_semantics=("parallel", "parallel"),
            vmem_limit_bytes=vmem_limit,
        ),
        # TODO(synk): if the W DMA is still exposed at tile boundaries, try
        # pipeline_mode=pl.Buffered(3) on the W BlockSpec (costs one extra W tile of VMEM).
    )(attn_t, w_t, pi_t)

    if Np != N:
        out = out[..., :N]
    return out


# ---------------------------------------------------------------------------
# Glue (plain JAX): neighbor gather + superpixel-index matching, built lane-dense.
# ---------------------------------------------------------------------------
def matched_neighbor_sims(sims, sinds, ws):
    """W[b,s,k,n] = P(L_{j(n,k)} = sinds[b,n,s]), produced directly as (B, NSP, K, N).

    Neighbor j(n,k) is pixel (clamp(h+dh), clamp(w+dw)) for the k-th offset of the ws x ws
    window; its probability of belonging to superpixel sinds[i,s] is found by matching
    global superpixel indices among j's own 9 candidates (0 if not a candidate of j).
    Built with the s axis leading so the dominant W stream needs no big transpose.
    """
    B, H, Wd, _ = sims.shape
    r = ws // 2
    sinds_s = jnp.moveaxis(sinds, -1, 1)                        # (B, NSP, H, W)
    w_k = []
    for dh in range(-r, r + 1):
        for dw in range(-r, r + 1):
            hj = jnp.clip(jnp.arange(H) + dh, 0, H - 1)
            wj = jnp.clip(jnp.arange(Wd) + dw, 0, Wd - 1)
            nb_sims = sims[:, hj][:, :, wj]                     # (B, H, W, NSP_t)
            nb_sinds = sinds[:, hj][:, :, wj]                   # (B, H, W, NSP_t)
            match = (nb_sinds[:, None] == sinds_s[:, :, :, :, None])   # (B,S,H,W,T)
            wk = jnp.sum(jnp.where(match, nb_sims[:, None], 0.0), axis=-1)  # (B,S,H,W)
            w_k.append(wk)
    Wn = jnp.stack(w_k, axis=2)                                 # (B, NSP, K, H, W)
    return Wn.reshape(B, NSP, ws * ws, H * Wd)                  # (B, NSP, K, N)


def attn_reweight_forward(attn, sims, sinds, ws, *, lane_chunk=512, w_dtype=jnp.float32):
    """Full AttnReweight.forward. attn (B,HD,H,W,K), sims (B,H,W,9), sinds (B,H,W,9).

    Set w_dtype=jnp.bfloat16 on bandwidth-bound chips (v5e/v6e) to halve the dominant
    W/pi HBM streams (numerics ~3 significant digits on [0,1] probabilities).
    """
    B, HD, H, Wd, K = attn.shape
    N = H * Wd

    w_t = matched_neighbor_sims(sims, sinds, ws).astype(w_dtype)        # (B, NSP, K, N)
    pi_t = jnp.moveaxis(sims.reshape(B, N, NSP), -1, 1).astype(w_dtype) # (B, NSP, N)

    # attn/out transposes are forced by the module's (B,HD,H,W,K) interface; they are the
    # smaller streams (72 B/pixel/head vs W's 324 B/pixel).
    attn_t = jnp.swapaxes(attn.reshape(B, HD, N, K), -1, -2)            # (B, HD, K, N)
    out_t = attn_reweight_pallas(attn_t, w_t, pi_t, lane_chunk=lane_chunk)
    return jnp.swapaxes(out_t, -1, -2).reshape(B, HD, H, Wd, K)


# ---------------------------------------------------------------------------
# Pure-JAX reference (original layout, independent code path) for correctness.
# ---------------------------------------------------------------------------
def _matched_neighbor_sims_ref(sims, sinds, ws):
    B, H, Wd, _ = sims.shape
    r = ws // 2
    nb_sims, nb_sinds = [], []
    for dh in range(-r, r + 1):
        for dw in range(-r, r + 1):
            hj = jnp.clip(jnp.arange(H) + dh, 0, H - 1)
            wj = jnp.clip(jnp.arange(Wd) + dw, 0, Wd - 1)
            nb_sims.append(sims[:, hj][:, :, wj])
            nb_sinds.append(sinds[:, hj][:, :, wj])
    nb_sims = jnp.stack(nb_sims, axis=3)                        # (B,H,W,K,NSP_t)
    nb_sinds = jnp.stack(nb_sinds, axis=3)
    match = (nb_sinds[:, :, :, None, :, :] == sinds[:, :, :, :, None, None])
    return jnp.sum(jnp.where(match, nb_sims[:, :, :, None, :, :], 0.0), axis=-1)  # (B,H,W,NSP,K)


def attn_reweight_reference(attn, sims, sinds, ws):
    Wn = _matched_neighbor_sims_ref(sims, sinds, ws)            # (B,H,W,NSP,K)
    c = jnp.max(attn, axis=-1, keepdims=True)
    e = jnp.exp(attn - c)                                       # (B,HD,H,W,K)
    num = Wn[:, None] * e[..., None, :]                         # (B,HD,H,W,NSP,K)
    den = EPS + jnp.sum(num, axis=-1, keepdims=True)
    a = num / den
    pi = sims[:, None, :, :, :, None]                           # (B,1,H,W,NSP,1)
    return jnp.sum(pi * a, axis=4)                              # (B,HD,H,W,K)


if __name__ == "__main__":
    B, HD, H, W = 2, 2, 16, 16
    ws = 3
    K = ws * ws
    sp = 4                                # superpixel cell stride
    SH, SW = H // sp, W // sp             # superpixel grid

    key = jax.random.PRNGKey(0)
    k_attn, k_sims = jax.random.split(key)

    attn = jax.random.normal(k_attn, (B, HD, H, W, K), dtype=jnp.float32)

    # Candidate superpixel indices: 3x3 neighborhood on the superpixel grid (clamped).
    hh = jnp.arange(H) // sp
    wwc = jnp.arange(W) // sp
    cands = []
    for dh in (-1, 0, 1):
        for dw in (-1, 0, 1):
            ch = jnp.clip(hh + dh, 0, SH - 1)[:, None]
            cw = jnp.clip(wwc + dw, 0, SW - 1)[None, :]
            cands.append(ch * SW + cw)                          # (H, W)
    sinds = jnp.broadcast_to(jnp.stack(cands, axis=-1)[None], (B, H, W, NSP))
    sinds = sinds.astype(jnp.int32)

    # Soft assignment probabilities over the 9 candidates.
    sims = jax.nn.softmax(
        jax.random.normal(k_sims, (B, H, W, NSP), dtype=jnp.float32), axis=-1)

    # f32 path: strict check against the independent pure-JAX reference.
    out = attn_reweight_forward(attn, sims, sinds, ws)
    out = jax.block_until_ready(out)
    ref = attn_reweight_reference(attn, sims, sinds, ws)
    assert out.shape == (B, HD, H, W, K)
    assert jnp.allclose(out, ref, atol=1e-5, rtol=1e-5), "mismatch vs JAX reference"

    # bf16 W/pi path (v5e/v6e bandwidth optimization): loose check only.
    out_bf = attn_reweight_forward(attn, sims, sinds, ws, w_dtype=jnp.bfloat16)
    out_bf = jax.block_until_ready(out_bf)
    assert out_bf.shape == (B, HD, H, W, K)
    assert bool(jnp.max(jnp.abs(out_bf - ref)) < 0.05), "bf16-stream path diverged"

    print("KERNEL_OK")
</pallas_src>

<mosaic_0001>
module attributes {stable_mosaic.version = 11 : i64} {
  func.func @attn_reweight_kernel(%arg0: i32, %arg1: i32, %arg2: memref<1x2x9x256xf32, #tpu.memory_space<vmem>>, %arg3: memref<1x9x9x256xf32, #tpu.memory_space<vmem>>, %arg4: memref<1x9x256xf32, #tpu.memory_space<vmem>>, %arg5: memref<1x2x9x256xf32, #tpu.memory_space<vmem>>) attributes {dimension_semantics = [#tpu.dimension_semantics<parallel>, #tpu.dimension_semantics<parallel>], iteration_bounds = array<i64: 2, 1>, scalar_prefetch = 0 : i64, scratch_operands = 0 : i64, tpu.core_type = #tpu.core_type<tc>, window_params = [{transform_indices = @transform_0, window_bounds = array<i64: 1, 2, 9, 256>}, {transform_indices = @transform_1, window_bounds = array<i64: 1, 9, 9, 256>}, {transform_indices = @transform_2, window_bounds = array<i64: 1, 9, 256>}, {transform_indices = @transform_3, window_bounds = array<i64: 1, 2, 9, 256>}]} {
    %c0 = arith.constant 0 : index
    %c0_0 = arith.constant 0 : index
    %c0_1 = arith.constant 0 : index
    %0 = vector.load %arg4[%c0, %c0_0, %c0_1] : memref<1x9x256xf32, #tpu.memory_space<vmem>>, vector<1x9x256xf32>
    %1 = vector.shape_cast %0 : vector<1x9x256xf32> to vector<9x256xf32>
    %c0_i32 = arith.constant 0 : i32
    %c0_2 = arith.constant 0 : index
    %2 = arith.index_cast %c0_i32 : i32 to index
    %c0_3 = arith.constant 0 : index
    %c0_4 = arith.constant 0 : index
    %3 = vector.load %arg2[%c0_2, %2, %c0_3, %c0_4] : memref<1x2x9x256xf32, #tpu.memory_space<vmem>>, vector<1x1x9x256xf32>
    %4 = vector.shape_cast %3 : vector<1x1x9x256xf32> to vector<9x256xf32>
    %cst = arith.constant dense<0xFF800000> : vector<256xf32>
    %5 = vector.multi_reduction <maximumf>, %4, %cst [0] : vector<9x256xf32> to vector<256xf32>
    %6 = vector.shape_cast %5 : vector<256xf32> to vector<1x256xf32>
    %7 = vector.broadcast %6 : vector<1x256xf32> to vector<9x256xf32>
    %8 = arith.subf %4, %7 : vector<9x256xf32>
    %9 = math.exp %8 : vector<9x256xf32>
    %cst_5 = arith.constant 0.000000e+00 : f32
    %10 = vector.broadcast %cst_5 : f32 to vector<9x256xf32>
    %c0_6 = arith.constant 0 : index
    %c0_7 = arith.constant 0 : index
    %c0_8 = arith.constant 0 : index
    %c0_9 = arith.constant 0 : index
    %11 = vector.load %arg3[%c0_6, %c0_7, %c0_8, %c0_9] : memref<1x9x9x256xf32, #tpu.memory_space<vmem>>, vector<1x1x9x256xf32>
    %12 = vector.shape_cast %11 : vector<1x1x9x256xf32> to vector<9x256xf32>
    %13 = arith.mulf %12, %9 : vector<9x256xf32>
    %cst_10 = arith.constant dense<0.000000e+00> : vector<256xf32>
    %14 = vector.multi_reduction <add>, %13, %cst_10 [0] : vector<9x256xf32> to vector<256xf32>
    %15 = vector.shape_cast %14 : vector<256xf32> to vector<1x256xf32>
    %cst_11 = arith.constant 1.000000e-10 : f32
    %16 = vector.broadcast %cst_11 : f32 to vector<1x256xf32>
    %17 = arith.addf %16, %15 : vector<1x256xf32>
    %18 = tpu.reciprocal %17 {approx = true} : vector<1x256xf32> -> vector<1x256xf32>
    %19 = arith.mulf %17, %18 : vector<1x256xf32>
    %cst_12 = arith.constant 2.000000e+00 : f32
    %20 = vector.broadcast %cst_12 : f32 to vector<1x256xf32>
    %21 = arith.subf %20, %19 : vector<1x256xf32>
    %22 = arith.mulf %18, %21 : vector<1x256xf32>
    %23 = vector.extract_strided_slice %1 {offsets = [0, 0], sizes = [1, 256], strides = [1, 1]} : vector<9x256xf32> to vector<1x256xf32>
    %24 = arith.mulf %23, %22 : vector<1x256xf32>
    %25 = vector.broadcast %24 : vector<1x256xf32> to vector<9x256xf32>
    %26 = arith.mulf %25, %13 : vector<9x256xf32>
    %27 = arith.addf %10, %26 : vector<9x256xf32>
    %c0_13 = arith.constant 0 : index
    %c1 = arith.constant 1 : index
    %c0_14 = arith.constant 0 : index
    %c0_15 = arith.constant 0 : index
    %28 = vector.load %arg3[%c0_13, %c1, %c0_14, %c0_15] : memref<1x9x9x256xf32, #tpu.memory_space<vmem>>, vector<1x1x9x256xf32>
    %29 = vector.shape_cast %28 : vector<1x1x9x256xf32> to vector<9x256xf32>
    %30 = arith.mulf %29, %9 : vector<9x256xf32>
    %cst_16 = arith.constant dense<0.000000e+00> : vector<256xf32>
    %31 = vector.multi_reduction <add>, %30, %cst_16 [0] : vector<9x256xf32> to vector<256xf32>
    %32 = vector.shape_cast %31 : vector<256xf32> to vector<1x256xf32>
    %cst_17 = arith.constant 1.000000e-10 : f32
    %33 = vector.broadcast %cst_17 : f32 to vector<1x256xf32>
    %34 = arith.addf %33, %32 : vector<1x256xf32>
    %35 = tpu.reciprocal %34 {approx = true} : vector<1x256xf32> -> vector<1x256xf32>
    %36 = arith.mulf %34, %35 : vector<1x256xf32>
    %cst_18 = arith.constant 2.000000e+00 : f32
    %37 = vector.broadcast %cst_18 : f32 to vector<1x256xf32>
    %38 = arith.subf %37, %36 : vector<1x256xf32>
    %39 = arith.mulf %35, %38 : vector<1x256xf32>
    %40 = vector.extract_strided_slice %1 {offsets = [1, 0], sizes = [1, 256], strides = [1, 1]} : vector<9x256xf32> to vector<1x256xf32>
    %41 = arith.mulf %40, %39 : vector<1x256xf32>
    %42 = vector.broadcast %41 : vector<1x256xf32> to vector<9x256xf32>
    %43 = arith.mulf %42, %30 : vector<9x256xf32>
    %44 = arith.addf %27, %43 : vector<9x256xf32>
    %c0_19 = arith.constant 0 : index
    %c2 = arith.constant 2 : index
    %c0_20 = arith.constant 0 : index
    %c0_21 = arith.constant 0 : index
    %45 = vector.load %arg3[%c0_19, %c2, %c0_20, %c0_21] : memref<1x9x9x256xf32, #tpu.memory_space<vmem>>, vector<1x1x9x256xf32>
    %46 = vector.shape_cast %45 : vector<1x1x9x256xf32> to vector<9x256xf32>
    %47 = arith.mulf %46, %9 : vector<9x256xf32>
    %cst_22 = arith.constant dense<0.000000e+00> : vector<256xf32>
    %48 = vector.multi_reduction <add>, %47, %cst_22 [0] : vector<9x256xf32> to vector<256xf32>
    %49 = vector.shape_cast %48 : vector<256xf32> to vector<1x256xf32>
    %cst_23 = arith.constant 1.000000e-10 : f32
    %50 = vector.broadcast %cst_23 : f32 to vector<1x256xf32>
    %51 = arith.addf %50, %49 : vector<1x256xf32>
    %52 = tpu.reciprocal %51 {approx = true} : vector<1x256xf32> -> vector<1x256xf32>
    %53 = arith.mulf %51, %52 : vector<1x256xf32>
    %cst_24 = arith.constant 2.000000e+00 : f32
    %54 = vector.broadcast %cst_24 : f32 to vector<1x256xf32>
    %55 = arith.subf %54, %53 : vector<1x256xf32>
    %56 = arith.mulf %52, %55 : vector<1x256xf32>
    %57 = vector.extract_strided_slice %1 {offsets = [2, 0], sizes = [1, 256], strides = [1, 1]} : vector<9x256xf32> to vector<1x256xf32>
    %58 = arith.mulf %57, %56 : vector<1x256xf32>
    %59 = vector.broadcast %58 : vector<1x256xf32> to vector<9x256xf32>
    %60 = arith.mulf %59, %47 : vector<9x256xf32>
    %61 = arith.addf %44, %60 : vector<9x256xf32>
    %c0_25 = arith.constant 0 : index
    %c3 = arith.constant 3 : index
    %c0_26 = arith.constant 0 : index
    %c0_27 = arith.constant 0 : index
    %62 = vector.load %arg3[%c0_25, %c3, %c0_26, %c0_27] : memref<1x9x9x256xf32, #tpu.memory_space<vmem>>, vector<1x1x9x256xf32>
    %63 = vector.shape_cast %62 : vector<1x1x9x256xf32> to vector<9x256xf32>
    %64 = arith.mulf %63, %9 : vector<9x256xf32>
    %cst_28 = arith.constant dense<0.000000e+00> : vector<256xf32>
    %65 = vector.multi_reduction <add>, %64, %cst_28 [0] : vector<9x256xf32> to vector<256xf32>
    %66 = vector.shape_cast %65 : vector<256xf32> to vector<1x256xf32>
    %cst_29 = arith.constant 1.000000e-10 : f32
    %67 = vector.broadcast %cst_29 : f32 to vector<1x256xf32>
    %68 = arith.addf %67, %66 : vector<1x256xf32>
    %69 = tpu.reciprocal %68 {approx = true} : vector<1x256xf32> -> vector<1x256xf32>
    %70 = arith.mulf %68, %69 : vector<1x256xf32>
    %cst_30 = arith.constant 2.000000e+00 : f32
    %71 = vector.broadcast %cst_30 : f32 to vector<1x256xf32>
    %72 = arith.subf %71, %70 : vector<1x256xf32>
    %73 = arith.mulf %69, %72 : vector<1x256xf32>
    %74 = vector.extract_strided_slice %1 {offsets = [3, 0], sizes = [1, 256], strides = [1, 1]} : vector<9x256xf32> to vector<1x256xf32>
    %75 = arith.mulf %74, %73 : vector<1x256xf32>
    %76 = vector.broadcast %75 : vector<1x256xf32> to vector<9x256xf32>
    %77 = arith.mulf %76, %64 : vector<9x256xf32>
    %78 = arith.addf %61, %77 : vector<9x256xf32>
    %c0_31 = arith.constant 0 : index
    %c4 = arith.constant 4 : index
    %c0_32 = arith.constant 0 : index
    %c0_33 = arith.constant 0 : index
    %79 = vector.load %arg3[%c0_31, %c4, %c0_32, %c0_33] : memref<1x9x9x256xf32, #tpu.memory_space<vmem>>, vector<1x1x9x256xf32>
    %80 = vector.shape_cast %79 : vector<1x1x9x256xf32> to vector<9x256xf32>
    %81 = arith.mulf %80, %9 : vector<9x256xf32>
    %cst_34 = arith.constant dense<0.000000e+00> : vector<256xf32>
    %82 = vector.multi_reduction <add>, %81, %cst_34 [0] : vector<9x256xf32> to vector<256xf32>
    %83 = vector.shape_cast %82 : vector<256xf32> to vector<1x256xf32>
    %cst_35 = arith.constant 1.000000e-10 : f32
    %84 = vector.broadcast %cst_35 : f32 to vector<1x256xf32>
    %85 = arith.addf %84, %83 : vector<1x256xf32>
    %86 = tpu.reciprocal %85 {approx = true} : vector<1x256xf32> -> vector<1x256xf32>
    %87 = arith.mulf %85, %86 : vector<1x256xf32>
    %cst_36 = arith.constant 2.000000e+00 : f32
    %88 = vector.broadcast %cst_36 : f32 to vector<1x256xf32>
    %89 = arith.subf %88, %87 : vector<1x256xf32>
    %90 = arith.mulf %86, %89 : vector<1x256xf32>
    %91 = vector.extract_strided_slice %1 {offsets = [4, 0], sizes = [1, 256], strides = [1, 1]} : vector<9x256xf32> to vector<1x256xf32>
    %92 = arith.mulf %91, %90 : vector<1x256xf32>
    %93 = vector.broadcast %92 : vector<1x256xf32> to vector<9x256xf32>
    %94 = arith.mulf %93, %81 : vector<9x256xf32>
    %95 = arith.addf %78, %94 : vector<9x256xf32>
    %c0_37 = arith.constant 0 : index
    %c5 = arith.constant 5 : index
    %c0_38 = arith.constant 0 : index
    %c0_39 = arith.constant 0 : index
    %96 = vector.load %arg3[%c0_37, %c5, %c0_38, %c0_39] : memref<1x9x9x256xf32, #tpu.memory_space<vmem>>, vector<1x1x9x256xf32>
    %97 = vector.shape_cast %96 : vector<1x1x9x256xf32> to vector<9x256xf32>
    %98 = arith.mulf %97, %9 : vector<9x256xf32>
    %cst_40 = arith.constant dense<0.000000e+00> : vector<256xf32>
    %99 = vector.multi_reduction <add>, %98, %cst_40 [0] : vector<9x256xf32> to vector<256xf32>
    %100 = vector.shape_cast %99 : vector<256xf32> to vector<1x256xf32>
    %cst_41 = arith.constant 1.000000e-10 : f32
    %101 = vector.broadcast %cst_41 : f32 to vector<1x256xf32>
    %102 = arith.addf %101, %100 : vector<1x256xf32>
    %103 = tpu.reciprocal %102 {approx = true} : vector<1x256xf32> -> vector<1x256xf32>
    %104 = arith.mulf %102, %103 : vector<1x256xf32>
    %cst_42 = arith.constant 2.000000e+00 : f32
    %105 = vector.broadcast %cst_42 : f32 to vector<1x256xf32>
    %106 = arith.subf %105, %104 : vector<1x256xf32>
    %107 = arith.mulf %103, %106 : vector<1x256xf32>
    %108 = vector.extract_strided_slice %1 {offsets = [5, 0], sizes = [1, 256], strides = [1, 1]} : vector<9x256xf32> to vector<1x256xf32>
    %109 = arith.mulf %108, %107 : vector<1x256xf32>
    %110 = vector.broadcast %109 : vector<1x256xf32> to vector<9x256xf32>
    %111 = arith.mulf %110, %98 : vector<9x256xf32>
    %112 = arith.addf %95, %111 : vector<9x256xf32>
    %c0_43 = arith.constant 0 : index
    %c6 = arith.constant 6 : index
    %c0_44 = arith.constant 0 : index
    %c0_45 = arith.constant 0 : index
    %113 = vector.load %arg3[%c0_43, %c6, %c0_44, %c0_45] : memref<1x9x9x256xf32, #tpu.memory_space<vmem>>, vector<1x1x9x256xf32>
    %114 = vector.shape_cast %113 : vector<1x1x9x256xf32> to vector<9x256xf32>
    %115 = arith.mulf %114, %9 : vector<9x256xf32>
    %cst_46 = arith.constant dense<0.000000e+00> : vector<256xf32>
    %116 = vector.multi_reduction <add>, %115, %cst_46 [0] : vector<9x256xf32> to vector<256xf32>
    %117 = vector.shape_cast %116 : vector<256xf32> to vector<1x256xf32>
    %cst_47 = arith.constant 1.000000e-10 : f32
    %118 = vector.broadcast %cst_47 : f32 to vector<1x256xf32>
    %119 = arith.addf %118, %117 : vector<1x256xf32>
    %120 = tpu.reciprocal %119 {approx = true} : vector<1x256xf32> -> vector<1x256xf32>
    %121 = arith.mulf %119, %120 : vector<1x256xf32>
    %cst_48 = arith.constant 2.000000e+00 : f32
    %122 = vector.broadcast %cst_48 : f32 to vector<1x256xf32>
    %123 = arith.subf %122, %121 : vector<1x256xf32>
    %124 = arith.mulf %120, %123 : vector<1x256xf32>
    %125 = vector.extract_strided_slice %1 {offsets = [6, 0], sizes = [1, 256], strides = [1, 1]} : vector<9x256xf32> to vector<1x256xf32>
    %126 = arith.mulf %125, %124 : vector<1x256xf32>
    %127 = vector.broadcast %126 : vector<1x256xf32> to vector<9x256xf32>
    %128 = arith.mulf %127, %115 : vector<9x256xf32>
    %129 = arith.addf %112, %128 : vector<9x256xf32>
    %c0_49 = arith.constant 0 : index
    %c7 = arith.constant 7 : index
    %c0_50 = arith.constant 0 : index
    %c0_51 = arith.constant 0 : index
    %130 = vector.load %arg3[%c0_49, %c7, %c0_50, %c0_51] : memref<1x9x9x256xf32, #tpu.memory_space<vmem>>, vector<1x1x9x256xf32>
    %131 = vector.shape_cast %130 : vector<1x1x9x256xf32> to vector<9x256xf32>
    %132 = arith.mulf %131, %9 : vector<9x256xf32>
    %cst_52 = arith.constant dense<0.000000e+00> : vector<256xf32>
    %133 = vector.multi_reduction <add>, %132, %cst_52 [0] : vector<9x256xf32> to vector<256xf32>
    %134 = vector.shape_cast %133 : vector<256xf32> to vector<1x256xf32>
    %cst_53 = arith.constant 1.000000e-10 : f32
    %135 = vector.broadcast %cst_53 : f32 to vector<1x256xf32>
    %136 = arith.addf %135, %134 : vector<1x256xf32>
    %137 = tpu.reciprocal %136 {approx = true} : vector<1x256xf32> -> vector<1x256xf32>
    %138 = arith.mulf %136, %137 : vector<1x256xf32>
    %cst_54 = arith.constant 2.000000e+00 : f32
    %139 = vector.broadcast %cst_54 : f32 to vector<1x256xf32>
    %140 = arith.subf %139, %138 : vector<1x256xf32>
    %141 = arith.mulf %137, %140 : vector<1x256xf32>
    %142 = vector.extract_strided_slice %1 {offsets = [7, 0], sizes = [1, 256], strides = [1, 1]} : vector<9x256xf32> to vector<1x256xf32>
    %143 = arith.mulf %142, %141 : vector<1x256xf32>
    %144 = vector.broadcast %143 : vector<1x256xf32> to vector<9x256xf32>
    %145 = arith.mulf %144, %132 : vector<9x256xf32>
    %146 = arith.addf %129, %145 : vector<9x256xf32>
    %c0_55 = arith.constant 0 : index
    %c8 = arith.constant 8 : index
    %c0_56 = arith.constant 0 : index
    %c0_57 = arith.constant 0 : index
    %147 = vector.load %arg3[%c0_55, %c8, %c0_56, %c0_57] : memref<1x9x9x256xf32, #tpu.memory_space<vmem>>, vector<1x1x9x256xf32>
    %148 = vector.shape_cast %147 : vector<1x1x9x256xf32> to vector<9x256xf32>
    %149 = arith.mulf %148, %9 : vector<9x256xf32>
    %cst_58 = arith.constant dense<0.000000e+00> : vector<256xf32>
    %150 = vector.multi_reduction <add>, %149, %cst_58 [0] : vector<9x256xf32> to vector<256xf32>
    %151 = vector.shape_cast %150 : vector<256xf32> to vector<1x256xf32>
    %cst_59 = arith.constant 1.000000e-10 : f32
    %152 = vector.broadcast %cst_59 : f32 to vector<1x256xf32>
    %153 = arith.addf %152, %151 : vector<1x256xf32>
    %154 = tpu.reciprocal %153 {approx = true} : vector<1x256xf32> -> vector<1x256xf32>
    %155 = arith.mulf %153, %154 : vector<1x256xf32>
    %cst_60 = arith.constant 2.000000e+00 : f32
    %156 = vector.broadcast %cst_60 : f32 to vector<1x256xf32>
    %157 = arith.subf %156, %155 : vector<1x256xf32>
    %158 = arith.mulf %154, %157 : vector<1x256xf32>
    %159 = vector.extract_strided_slice %1 {offsets = [8, 0], sizes = [1, 256], strides = [1, 1]} : vector<9x256xf32> to vector<1x256xf32>
    %160 = arith.mulf %159, %158 : vector<1x256xf32>
    %161 = vector.broadcast %160 : vector<1x256xf32> to vector<9x256xf32>
    %162 = arith.mulf %161, %149 : vector<9x256xf32>
    %163 = arith.addf %146, %162 : vector<9x256xf32>
    %c0_61 = arith.constant 0 : index
    %164 = arith.index_cast %c0_i32 : i32 to index
    %c0_62 = arith.constant 0 : index
    %c0_63 = arith.constant 0 : index
    %165 = vector.load %arg5[%c0_61, %164, %c0_62, %c0_63] : memref<1x2x9x256xf32, #tpu.memory_space<vmem>>, vector<1x1x9x256xf32>
    %166 = vector.shape_cast %165 : vector<1x1x9x256xf32> to vector<9x256xf32>
    %167 = vector.shape_cast %163 : vector<9x256xf32> to vector<1x1x9x256xf32>
    tpu.vector_store %arg5[%c0_61, %164, %c0_62, %c0_63], %167 {strides = array<i32>} : memref<1x2x9x256xf32, #tpu.memory_space<vmem>>, vector<1x1x9x256xf32>,
    %c1_i32 = arith.constant 1 : i32
    %c0_64 = arith.constant 0 : index
    %168 = arith.index_cast %c1_i32 : i32 to index
    %c0_65 = arith.constant 0 : index
    %c0_66 = arith.constant 0 : index
    %169 = vector.load %arg2[%c0_64, %168, %c0_65, %c0_66] : memref<1x2x9x256xf32, #tpu.memory_space<vmem>>, vector<1x1x9x256xf32>
    %170 = vector.shape_cast %169 : vector<1x1x9x256xf32> to vector<9x256xf32>
    %cst_67 = arith.constant dense<0xFF800000> : vector<256xf32>
    %171 = vector.multi_reduction <maximumf>, %170, %cst_67 [0] : vector<9x256xf32> to vector<256xf32>
    %172 = vector.shape_cast %171 : vector<256xf32> to vector<1x256xf32>
    %173 = vector.broadcast %172 : vector<1x256xf32> to vector<9x256xf32>
    %174 = arith.subf %170, %173 : vector<9x256xf32>
    %175 = math.exp %174 : vector<9x256xf32>
    %cst_68 = arith.constant 0.000000e+00 : f32
    %176 = vector.broadcast %cst_68 : f32 to vector<9x256xf32>
    %c0_69 = arith.constant 0 : index
    %c0_70 = arith.constant 0 : index
    %c0_71 = arith.constant 0 : index
    %c0_72 = arith.constant 0 : index
    %177 = vector.load %arg3[%c0_69, %c0_70, %c0_71, %c0_72] : memref<1x9x9x256xf32, #tpu.memory_space<vmem>>, vector<1x1x9x256xf32>
    %178 = vector.shape_cast %177 : vector<1x1x9x256xf32> to vector<9x256xf32>
    %179 = arith.mulf %178, %175 : vector<9x256xf32>
    %cst_73 = arith.constant dense<0.000000e+00> : vector<256xf32>
    %180 = vector.multi_reduction <add>, %179, %cst_73 [0] : vector<9x256xf32> to vector<256xf32>
    %181 = vector.shape_cast %180 : vector<256xf32> to vector<1x256xf32>
    %cst_74 = arith.constant 1.000000e-10 : f32
    %182 = vector.broadcast %cst_74 : f32 to vector<1x256xf32>
    %183 = arith.addf %182, %181 : vector<1x256xf32>
    %184 = tpu.reciprocal %183 {approx = true} : vector<1x256xf32> -> vector<1x256xf32>
    %185 = arith.mulf %183, %184 : vector<1x256xf32>
    %cst_75 = arith.constant 2.000000e+00 : f32
    %186 = vector.broadcast %cst_75 : f32 to vector<1x256xf32>
    %187 = arith.subf %186, %185 : vector<1x256xf32>
    %188 = arith.mulf %184, %187 : vector<1x256xf32>
    %189 = vector.extract_strided_slice %1 {offsets = [0, 0], sizes = [1, 256], strides = [1, 1]} : vector<9x256xf32> to vector<1x256xf32>
    %190 = arith.mulf %189, %188 : vector<1x256xf32>
    %191 = vector.broadcast %190 : vector<1x256xf32> to vector<9x256xf32>
    %192 = arith.mulf %191, %179 : vector<9x256xf32>
    %193 = arith.addf %176, %192 : vector<9x256xf32>
    %c0_76 = arith.constant 0 : index
    %c1_77 = arith.constant 1 : index
    %c0_78 = arith.constant 0 : index
    %c0_79 = arith.constant 0 : index
    %194 = vector.load %arg3[%c0_76, %c1_77, %c0_78, %c0_79] : memref<1x9x9x256xf32, #tpu.memory_space<vmem>>, vector<1x1x9x256xf32>
    %195 = vector.shape_cast %194 : vector<1x1x9x256xf32> to vector<9x256xf32>
    %196 = arith.mulf %195, %175 : vector<9x256xf32>
    %cst_80 = arith.constant dense<0.000000e+00> : vector<256xf32>
    %197 = vector.multi_reduction <add>, %196, %cst_80 [0] : vector<9x256xf32> to vector<256xf32>
    %198 = vector.shape_cast %197 : vector<256xf32> to vector<1x256xf32>
    %cst_81 = arith.constant 1.000000e-10 : f32
    %199 = vector.broadcast %cst_81 : f32 to vector<1x256xf32>
    %200 = arith.addf %199, %198 : vector<1x256xf32>
    %201 = tpu.reciprocal %200 {approx = true} : vector<1x256xf32> -> vector<1x256xf32>
    %202 = arith.mulf %200, %201 : vector<1x256xf32>
    %cst_82 = arith.constant 2.000000e+00 : f32
    %203 = vector.broadcast %cst_82 : f32 to vector<1x256xf32>
    %204 = arith.subf %203, %202 : vector<1x256xf32>
    %205 = arith.mulf %201, %204 : vector<1x256xf32>
    %206 = vector.extract_strided_slice %1 {offsets = [1, 0], sizes = [1, 256], strides = [1, 1]} : vector<9x256xf32> to vector<1x256xf32>
    %207 = arith.mulf %206, %205 : vector<1x256xf32>
    %208 = vector.broadcast %207 : vector<1x256xf32> to vector<9x256xf32>
    %209 = arith.mulf %208, %196 : vector<9x256xf32>
    %210 = arith.addf %193, %209 : vector<9x256xf32>
    %c0_83 = arith.constant 0 : index
    %c2_84 = arith.constant 2 : index
    %c0_85 = arith.constant 0 : index
    %c0_86 = arith.constant 0 : index
    %211 = vector.load %arg3[%c0_83, %c2_84, %c0_85, %c0_86] : memref<1x9x9x256xf32, #tpu.memory_space<vmem>>, vector<1x1x9x256xf32>
    %212 = vector.shape_cast %211 : vector<1x1x9x256xf32> to vector<9x256xf32>
    %213 = arith.mulf %212, %175 : vector<9x256xf32>
    %cst_87 = arith.constant dense<0.000000e+00> : vector<256xf32>
    %214 = vector.multi_reduction <add>, %213, %cst_87 [0] : vector<9x256xf32> to vector<256xf32>
    %215 = vector.shape_cast %214 : vector<256xf32> to vector<1x256xf32>
    %cst_88 = arith.constant 1.000000e-10 : f32
    %216 = vector.broadcast %cst_88 : f32 to vector<1x256xf32>
    %217 = arith.addf %216, %215 : vector<1x256xf32>
    %218 = tpu.reciprocal %217 {approx = true} : vector<1x256xf32> -> vector<1x256xf32>
    %219 = arith.mulf %217, %218 : vector<1x256xf32>
    %cst_89 = arith.constant 2.000000e+00 : f32
    %220 = vector.broadcast %cst_89 : f32 to vector<1x256xf32>
    %221 = arith.subf %220, %219 : vector<1x256xf32>
    %222 = arith.mulf %218, %221 : vector<1x256xf32>
    %223 = vector.extract_strided_slice %1 {offsets = [2, 0], sizes = [1, 256], strides = [1, 1]} : vector<9x256xf32> to vector<1x256xf32>
    %224 = arith.mulf %223, %222 : vector<1x256xf32>
    %225 = vector.broadcast %224 : vector<1x256xf32> to vector<9x256xf32>
    %226 = arith.mulf %225, %213 : vector<9x256xf32>
    %227 = arith.addf %210, %226 : vector<9x256xf32>
    %c0_90 = arith.constant 0 : index
    %c3_91 = arith.constant 3 : index
    %c0_92 = arith.constant 0 : index
    %c0_93 = arith.constant 0 : index
    %228 = vector.load %arg3[%c0_90, %c3_91, %c0_92, %c0_93] : memref<1x9x9x256xf32, #tpu.memory_space<vmem>>, vector<1x1x9x256xf32>
    %229 = vector.shape_cast %228 : vector<1x1x9x256xf32> to vector<9x256xf32>
    %230 = arith.mulf %229, %175 : vector<9x256xf32>
    %cst_94 = arith.constant dense<0.000000e+00> : vector<256xf32>
    %231 = vector.multi_reduction <add>, %230, %cst_94 [0] : vector<9x256xf32> to vector<256xf32>
    %232 = vector.shape_cast %231 : vector<256xf32> to vector<1x256xf32>
    %cst_95 = arith.constant 1.000000e-10 : f32
    %233 = vector.broadcast %cst_95 : f32 to vector<1x256xf32>
    %234 = arith.addf %233, %232 : vector<1x256xf32>
    %235 = tpu.reciprocal %234 {approx = true} : vector<1x256xf32> -> vector<1x256xf32>
    %236 = arith.mulf %234, %235 : vector<1x256xf32>
    %cst_96 = arith.constant 2.000000e+00 : f32
    %237 = vector.broadcast %cst_96 : f32 to vector<1x256xf32>
    %238 = arith.subf %237, %236 : vector<1x256xf32>
    %239 = arith.mulf %235, %238 : vector<1x256xf32>
    %240 = vector.extract_strided_slice %1 {offsets = [3, 0], sizes = [1, 256], strides = [1, 1]} : vector<9x256xf32> to vector<1x256xf32>
    %241 = arith.mulf %240, %239 : vector<1x256xf32>
    %242 = vector.broadcast %241 : vector<1x256xf32> to vector<9x256xf32>
    %243 = arith.mulf %242, %230 : vector<9x256xf32>
    %244 = arith.addf %227, %243 : vector<9x256xf32>
    %c0_97 = arith.constant 0 : index
    %c4_98 = arith.constant 4 : index
    %c0_99 = arith.constant 0 : index
    %c0_100 = arith.constant 0 : index
    %245 = vector.load %arg3[%c0_97, %c4_98, %c0_99, %c0_100] : memref<1x9x9x256xf32, #tpu.memory_space<vmem>>, vector<1x1x9x256xf32>
    %246 = vector.shape_cast %245 : vector<1x1x9x256xf32> to vector<9x256xf32>
    %247 = arith.mulf %246, %175 : vector<9x256xf32>
    %cst_101 = arith.constant dense<0.000000e+00> : vector<256xf32>
    %248 = vector.multi_reduction <add>, %247, %cst_101 [0] : vector<9x256xf32> to vector<256xf32>
    %249 = vector.shape_cast %248 : vector<256xf32> to vector<1x256xf32>
    %cst_102 = arith.constant 1.000000e-10 : f32
    %250 = vector.broadcast %cst_102 : f32 to vector<1x256xf32>
    %251 = arith.addf %250, %249 : vector<1x256xf32>
    %252 = tpu.reciprocal %251 {approx = true} : vector<1x256xf32> -> vector<1x256xf32>
    %253 = arith.mulf %251, %252 : vector<1x256xf32>
    %cst_103 = arith.constant 2.000000e+00 : f32
    %254 = vector.broadcast %cst_103 : f32 to vector<1x256xf32>
    %255 = arith.subf %254, %253 : vector<1x256xf32>
    %256 = arith.mulf %252, %255 : vector<1x256xf32>
    %257 = vector.extract_strided_slice %1 {offsets = [4, 0], sizes = [1, 256], strides = [1, 1]} : vector<9x256xf32> to vector<1x256xf32>
    %258 = arith.mulf %257, %256 : vector<1x256xf32>
    %259 = vector.broadcast %258 : vector<1x256xf32> to vector<9x256xf32>
    %260 = arith.mulf %259, %247 : vector<9x256xf32>
    %261 = arith.addf %244, %260 : vector<9x256xf32>
    %c0_104 = arith.constant 0 : index
    %c5_105 = arith.constant 5 : index
    %c0_106 = arith.constant 0 : index
    %c0_107 = arith.constant 0 : index
    %262 = vector.load %arg3[%c0_104, %c5_105, %c0_106, %c0_107] : memref<1x9x9x256xf32, #tpu.memory_space<vmem>>, vector<1x1x9x256xf32>
    %263 = vector.shape_cast %262 : vector<1x1x9x256xf32> to vector<9x256xf32>
    %264 = arith.mulf %263, %175 : vector<9x256xf32>
    %cst_108 = arith.constant dense<0.000000e+00> : vector<256xf32>
    %265 = vector.multi_reduction <add>, %264, %cst_108 [0] : vector<9x256xf32> to vector<256xf32>
    %266 = vector.shape_cast %265 : vector<256xf32> to vector<1x256xf32>
    %cst_109 = arith.constant 1.000000e-10 : f32
    %267 = vector.broadcast %cst_109 : f32 to vector<1x256xf32>
    %268 = arith.addf %267, %266 : vector<1x256xf32>
    %269 = tpu.reciprocal %268 {approx = true} : vector<1x256xf32> -> vector<1x256xf32>
    %270 = arith.mulf %268, %269 : vector<1x256xf32>
    %cst_110 = arith.constant 2.000000e+00 : f32
    %271 = vector.broadcast %cst_110 : f32 to vector<1x256xf32>
    %272 = arith.subf %271, %270 : vector<1x256xf32>
    %273 = arith.mulf %269, %272 : vector<1x256xf32>
    %274 = vector.extract_strided_slice %1 {offsets = [5, 0], sizes = [1, 256], strides = [1, 1]} : vector<9x256xf32> to vector<1x256xf32>
    %275 = arith.mulf %274, %273 : vector<1x256xf32>
    %276 = vector.broadcast %275 : vector<1x256xf32> to vector<9x256xf32>
    %277 = arith.mulf %276, %264 : vector<9x256xf32>
    %278 = arith.addf %261, %277 : vector<9x256xf32>
    %c0_111 = arith.constant 0 : index
    %c6_112 = arith.constant 6 : index
    %c0_113 = arith.constant 0 : index
    %c0_114 = arith.constant 0 : index
    %279 = vector.load %arg3[%c0_111, %c6_112, %c0_113, %c0_114] : memref<1x9x9x256xf32, #tpu.memory_space<vmem>>, vector<1x1x9x256xf32>
    %280 = vector.shape_cast %279 : vector<1x1x9x256xf32> to vector<9x256xf32>
    %281 = arith.mulf %280, %175 : vector<9x256xf32>
    %cst_115 = arith.constant dense<0.000000e+00> : vector<256xf32>
    %282 = vector.multi_reduction <add>, %281, %cst_115 [0] : vector<9x256xf32> to vector<256xf32>
    %283 = vector.shape_cast %282 : vector<256xf32> to vector<1x256xf32>
    %cst_116 = arith.constant 1.000000e-10 : f32
    %284 = vector.broadcast %cst_116 : f32 to vector<1x256xf32>
    %285 = arith.addf %284, %283 : vector<1x256xf32>
    %286 = tpu.reciprocal %285 {approx = true} : vector<1x256xf32> -> vector<1x256xf32>
    %287 = arith.mulf %285, %286 : vector<1x256xf32>
    %cst_117 = arith.constant 2.000000e+00 : f32
    %288 = vector.broadcast %cst_117 : f32 to vector<1x256xf32>
    %289 = arith.subf %288, %287 : vector<1x256xf32>
    %290 = arith.mulf %286, %289 : vector<1x256xf32>
    %291 = vector.extract_strided_slice %1 {offsets = [6, 0], sizes = [1, 256], strides = [1, 1]} : vector<9x256xf32> to vector<1x256xf32>
    %292 = arith.mulf %291, %290 : vector<1x256xf32>
    %293 = vector.broadcast %292 : vector<1x256xf32> to vector<9x256xf32>
    %294 = arith.mulf %293, %281 : vector<9x256xf32>
    %295 = arith.addf %278, %294 : vector<9x256xf32>
    %c0_118 = arith.constant 0 : index
    %c7_119 = arith.constant 7 : index
    %c0_120 = arith.constant 0 : index
    %c0_121 = arith.constant 0 : index
    %296 = vector.load %arg3[%c0_118, %c7_119, %c0_120, %c0_121] : memref<1x9x9x256xf32, #tpu.memory_space<vmem>>, vector<1x1x9x256xf32>
    %297 = vector.shape_cast %296 : vector<1x1x9x256xf32> to vector<9x256xf32>
    %298 = arith.mulf %297, %175 : vector<9x256xf32>
    %cst_122 = arith.constant dense<0.000000e+00> : vector<256xf32>
    %299 = vector.multi_reduction <add>, %298, %cst_122 [0] : vector<9x256xf32> to vector<256xf32>
    %300 = vector.shape_cast %299 : vector<256xf32> to vector<1x256xf32>
    %cst_123 = arith.constant 1.000000e-10 : f32
    %301 = vector.broadcast %cst_123 : f32 to vector<1x256xf32>
    %302 = arith.addf %301, %300 : vector<1x256xf32>
    %303 = tpu.reciprocal %302 {approx = true} : vector<1x256xf32> -> vector<1x256xf32>
    %304 = arith.mulf %302, %303 : vector<1x256xf32>
    %cst_124 = arith.constant 2.000000e+00 : f32
    %305 = vector.broadcast %cst_124 : f32 to vector<1x256xf32>
    %306 = arith.subf %305, %304 : vector<1x256xf32>
    %307 = arith.mulf %303, %306 : vector<1x256xf32>
    %308 = vector.extract_strided_slice %1 {offsets = [7, 0], sizes = [1, 256], strides = [1, 1]} : vector<9x256xf32> to vector<1x256xf32>
    %309 = arith.mulf %308, %307 : vector<1x256xf32>
    %310 = vector.broadcast %309 : vector<1x256xf32> to vector<9x256xf32>
    %311 = arith.mulf %310, %298 : vector<9x256xf32>
    %312 = arith.addf %295, %311 : vector<9x256xf32>
    %c0_125 = arith.constant 0 : index
    %c8_126 = arith.constant 8 : index
    %c0_127 = arith.constant 0 : index
    %c0_128 = arith.constant 0 : index
    %313 = vector.load %arg3[%c0_125, %c8_126, %c0_127, %c0_128] : memref<1x9x9x256xf32, #tpu.memory_space<vmem>>, vector<1x1x9x256xf32>
    %314 = vector.shape_cast %313 : vector<1x1x9x256xf32> to vector<9x256xf32>
    %315 = arith.mulf %314, %175 : vector<9x256xf32>
    %cst_129 = arith.constant dense<0.000000e+00> : vector<256xf32>
    %316 = vector.multi_reduction <add>, %315, %cst_129 [0] : vector<9x256xf32> to vector<256xf32>
    %317 = vector.shape_cast %316 : vector<256xf32> to vector<1x256xf32>
    %cst_130 = arith.constant 1.000000e-10 : f32
    %318 = vector.broadcast %cst_130 : f32 to vector<1x256xf32>
    %319 = arith.addf %318, %317 : vector<1x256xf32>
    %320 = tpu.reciprocal %319 {approx = true} : vector<1x256xf32> -> vector<1x256xf32>
    %321 = arith.mulf %319, %320 : vector<1x256xf32>
    %cst_131 = arith.constant 2.000000e+00 : f32
    %322 = vector.broadcast %cst_131 : f32 to vector<1x256xf32>
    %323 = arith.subf %322, %321 : vector<1x256xf32>
    %324 = arith.mulf %320, %323 : vector<1x256xf32>
    %325 = vector.extract_strided_slice %1 {offsets = [8, 0], sizes = [1, 256], strides = [1, 1]} : vector<9x256xf32> to vector<1x256xf32>
    %326 = arith.mulf %325, %324 : vector<1x256xf32>
    %327 = vector.broadcast %326 : vector<1x256xf32> to vector<9x256xf32>
    %328 = arith.mulf %327, %315 : vector<9x256xf32>
    %329 = arith.addf %312, %328 : vector<9x256xf32>
    %c0_132 = arith.constant 0 : index
    %330 = arith.index_cast %c1_i32 : i32 to index
    %c0_133 = arith.constant 0 : index
    %c0_134 = arith.constant 0 : index
    %331 = vector.load %arg5[%c0_132, %330, %c0_133, %c0_134] : memref<1x2x9x256xf32, #tpu.memory_space<vmem>>, vector<1x1x9x256xf32>
    %332 = vector.shape_cast %331 : vector<1x1x9x256xf32> to vector<9x256xf32>
    %333 = vector.shape_cast %329 : vector<9x256xf32> to vector<1x1x9x256xf32>
    tpu.vector_store %arg5[%c0_132, %330, %c0_133, %c0_134], %333 {strides = array<i32>} : memref<1x2x9x256xf32, #tpu.memory_space<vmem>>, vector<1x1x9x256xf32>,
    %c2_i32 = arith.constant 2 : i32
    return
  }
  func.func @transform_0(%arg0: i32, %arg1: i32) -> (i32, i32, i32, i32) {
    %c0_i32 = arith.constant 0 : i32
    %c0_i32_0 = arith.constant 0 : i32
    %c0_i32_1 = arith.constant 0 : i32
    return %arg0, %c0_i32, %c0_i32_0, %arg1 : i32, i32, i32, i32
  }
  func.func @transform_1(%arg0: i32, %arg1: i32) -> (i32, i32, i32, i32) {
    %c0_i32 = arith.constant 0 : i32
    %c0_i32_0 = arith.constant 0 : i32
    %c0_i32_1 = arith.constant 0 : i32
    return %arg0, %c0_i32, %c0_i32_0, %arg1 : i32, i32, i32, i32
  }
  func.func @transform_2(%arg0: i32, %arg1: i32) -> (i32, i32, i32) {
    %c0_i32 = arith.constant 0 : i32
    %c0_i32_0 = arith.constant 0 : i32
    return %arg0, %c0_i32, %arg1 : i32, i32, i32
  }
  func.func @transform_3(%arg0: i32, %arg1: i32) -> (i32, i32, i32, i32) {
    %c0_i32 = arith.constant 0 : i32
    %c0_i32_0 = arith.constant 0 : i32
    %c0_i32_1 = arith.constant 0 : i32
    return %arg0, %c0_i32, %c0_i32_0, %arg1 : i32, i32, i32, i32
  }
}

</mosaic_0001>

<llo_original>
// kernel: tpu_custom_call.1
$region0: #{tpu_custom_call.1}
  #allocation0 [shape = 'u32[]', space=smem, size = 0x4, offset = 0x4, fixed_abs, tag = 'smem constant byte address 0x4 - core index']
  #allocation1 [shape = 'u32[144,128]{1,0:T(1,128)}', space=vmem, size = 0x12000, scoped, tag = 'internal scratch']
  %s0 = inlined_call_operand.vmem [shape: f32[2,2,9,256], index: 0, kind: input, shape index: {}]
  %s1 = inlined_call_operand.vmem [shape: f32[2,9,9,256], index: 1, kind: input, shape index: {}]
  %s2 = inlined_call_operand.vmem [shape: f32[2,9,256], index: 2, kind: input, shape index: {}]
  %s3 = inlined_call_operand.vmem [shape: f32[2,2,9,256], index: 3, kind: output, shape index: {}]
  %s4 = sld [smem:[#allocation0]]
  $region45: #{tpu_custom_call.1} parent=0
    _
  %s6 = ssub.s32 1, %s4
  %s7 = scalar_select 0, %s6, %s4
  loop: start=0, step=1, limit=4
  $region2: #{tpu_custom_call.1} parent=0 // loop_pre_header
    _
  $region3: #{tpu_custom_call.1} parent=0 // loop_header
    %s9 = sphi 0, %s13
    %p10 = scmp.ge.s32.totalorder %s9, 4
    %s16 = sphi 0, %s28
    %s17 = sphi 0, %s24
    %s18 = sphi 0, %s16
    %s19 = sphi 0, %s17
    %s20 = sphi 0, %s18
    %s21 = sphi 0, %s19
    %s33 = sphi 0, %s35
    %s36 = sphi 0, %s33
    %s37 = sphi 0, %s36
    %s53 = sphi 0, %s37
    %s61 = sphi 0, %s63
    %s64 = sphi 0, %s61
    %s65 = sphi 0, %s64
    %s81 = sphi 0, %s65
    %s89 = sphi 0, %s91
    %s92 = sphi 0, %s89
    %s93 = sphi 0, %s92
    %s109 = sphi 0, %s93
    %s117 = sphi 0, %s119
    %s120 = sphi 0, %s117
    %s121 = sphi 0, %s120
    %s137 = sphi 0, %s121
  $region4: #{tpu_custom_call.1} parent=0 // loop_header_branch
    %12 = sbr.rel (%p10) target = $region8
  $region5: #{tpu_custom_call.1} parent=0 // loop_body
    %s14 = ssub.s32 %s9, 1
    %s15 = ssub.s32 %s9, 2
    %s22 = sadd.s32 1, %s17
    %p23 = scmp.ge.s32.totalorder %s22, 1
    %s24 = scalar_select %p23, 0, %s22
    %s25 = sadd.s32 1, %s16
    %s26 = scalar_select %p23, %s25, %s16
    %p27 = scmp.ge.s32.totalorder %s26, 2
    %s28 = scalar_select %p27, 0, %s26
    %s29 = ssub.s32 %s16, %s28
    %s30 = ssub.s32 %s17, %s24
    %s31 = sor.u32 %s29, %s30
    %p32 = scmp.eq.s32.totalorder %s31, 0
    %s34 = sadd.s32 %s33, 1
    %s35 = scalar_select %p32, %s33, %s34
    %p38 = pneg %p32
    %p39 = scmp.eq.s32.totalorder %s9, 1
    %p40 = por %p38, %p39
    %p41 = scmp.ne.s32.totalorder %s33, %s36
    %p42 = scmp.eq.s32.totalorder %s9, 0
    %p43 = por %p41, %p42
    %p44 = scmp.ne.s32.totalorder %s33, %s36
    %p45 = scmp.eq.s32.totalorder %s14, 1
    %p46 = por %p44, %p45
    %p47 = scmp.ne.s32.totalorder %s36, %s37
    %p48 = scmp.eq.s32.totalorder %s14, 0
    %p49 = por %p47, %p48
    %p50 = scmp.ne.s32.totalorder %s36, %s37
    %p51 = scmp.eq.s32.totalorder %s15, 1
    %p52 = por %p50, %p51
    %p54 = scmp.ne.s32.totalorder %s37, %s53
    %p55 = scmp.eq.s32.totalorder %s15, 0
    %p56 = por %p54, %p55
    %s57 = ssub.s32 %s16, %s28
    %s58 = ssub.s32 %s17, %s24
    %s59 = sor.u32 %s57, %s58
    %p60 = scmp.eq.s32.totalorder %s59, 0
    %s62 = sadd.s32 %s61, 1
    %s63 = scalar_select %p60, %s61, %s62
    %p66 = pneg %p60
    %p67 = scmp.eq.s32.totalorder %s9, 1
    %p68 = por %p66, %p67
    %p69 = scmp.ne.s32.totalorder %s61, %s64
    %p70 = scmp.eq.s32.totalorder %s9, 0
    %p71 = por %p69, %p70
    %p72 = scmp.ne.s32.totalorder %s61, %s64
    %p73 = scmp.eq.s32.totalorder %s14, 1
    %p74 = por %p72, %p73
    %p75 = scmp.ne.s32.totalorder %s64, %s65
    %p76 = scmp.eq.s32.totalorder %s14, 0
    %p77 = por %p75, %p76
    %p78 = scmp.ne.s32.totalorder %s64, %s65
    %p79 = scmp.eq.s32.totalorder %s15, 1
    %p80 = por %p78, %p79
    %p82 = scmp.ne.s32.totalorder %s65, %s81
    %p83 = scmp.eq.s32.totalorder %s15, 0
    %p84 = por %p82, %p83
    %s85 = ssub.s32 %s16, %s28
    %s86 = ssub.s32 %s17, %s24
    %s87 = sor.u32 %s85, %s86
    %p88 = scmp.eq.s32.totalorder %s87, 0
    %s90 = sadd.s32 %s89, 1
    %s91 = scalar_select %p88, %s89, %s90
    %p94 = pneg %p88
    %p95 = scmp.eq.s32.totalorder %s9, 1
    %p96 = por %p94, %p95
    %p97 = scmp.ne.s32.totalorder %s89, %s92
    %p98 = scmp.eq.s32.totalorder %s9, 0
    %p99 = por %p97, %p98
    %p100 = scmp.ne.s32.totalorder %s89, %s92
    %p101 = scmp.eq.s32.totalorder %s14, 1
    %p102 = por %p100, %p101
    %p103 = scmp.ne.s32.totalorder %s92, %s93
    %p104 = scmp.eq.s32.totalorder %s14, 0
    %p105 = por %p103, %p104
    %p106 = scmp.ne.s32.totalorder %s92, %s93
    %p107 = scmp.eq.s32.totalorder %s15, 1
    %p108 = por %p106, %p107
    %p110 = scmp.ne.s32.totalorder %s93, %s109
    %p111 = scmp.eq.s32.totalorder %s15, 0
    %p112 = por %p110, %p111
    %s113 = ssub.s32 %s16, %s28
    %s114 = ssub.s32 %s17, %s24
    %s115 = sor.u32 %s113, %s114
    %p116 = scmp.eq.s32.totalorder %s115, 0
    %s118 = sadd.s32 %s117, 1
    %s119 = scalar_select %p116, %s117, %s118
    %p122 = pneg %p116
    %p123 = scmp.eq.s32.totalorder %s9, 1
    %p124 = por %p122, %p123
    %p125 = scmp.ne.s32.totalorder %s117, %s120
    %p126 = scmp.eq.s32.totalorder %s9, 0
    %p127 = por %p125, %p126
    %p128 = scmp.ne.s32.totalorder %s117, %s120
    %p129 = scmp.eq.s32.totalorder %s14, 1
    %p130 = por %p128, %p129
    %p131 = scmp.ne.s32.totalorder %s120, %s121
    %p132 = scmp.eq.s32.totalorder %s14, 0
    %p133 = por %p131, %p132
    %p134 = scmp.ne.s32.totalorder %s120, %s121
    %p135 = scmp.eq.s32.totalorder %s15, 1
    %p136 = por %p134, %p135
    %p138 = scmp.ne.s32.totalorder %s121, %s137
    %p139 = scmp.eq.s32.totalorder %s15, 0
    %p140 = por %p138, %p139
    %p141 = scmp.le.s32.totalorder 1, %s9
    %p142 = scmp.lt.s32.totalorder %s9, 3
    %p143 = pnand %p141, %p142
    %p144 = pneg %p143
    // Predicated region
    $region9: #{tpu_custom_call.1} parent=5 // pred_check
      _
    $region10: #{tpu_custom_call.1} parent=5 // pred_check_branch
      %146 = sbr.rel (%p143) target = $region12
    $region11: #{tpu_custom_call.1} parent=5 // pred_region
      %s147 = ssub.s32 %s9, 1
    $region12: #{tpu_custom_call.1} parent=5 // pred_fallthru
      _
    %p148 = scmp.lt.s32.totalorder %s9, 2
    // Predicated region
    $region13: #{tpu_custom_call.1} parent=5 // pred_check
      %p149 = pneg %p148
    $region14: #{tpu_custom_call.1} parent=5 // pred_check_branch
      %151 = sbr.rel (%p149) target = $region16
    $region15: #{tpu_custom_call.1} parent=5 // pred_region
      // Predicated region
      $region17: #{tpu_custom_call.1} parent=15 // pred_check
        %p152 = pneg %p43
      $region18: #{tpu_custom_call.1} parent=15 // pred_check_branch
        %154 = sbr.rel (%p152) target = $region20
      $region19: #{tpu_custom_call.1} parent=15 // pred_region
        %s155 = smul.u32 2, %s17
        %p156 = scmp.lt.s32.totalorder %s16, 1
        %s157 = scalar_select %p156, %s16, 1
        %p158 = scmp.lt.s32.totalorder %s155, 1
        %s159 = scalar_select %p158, %s155, 1
        %s160 = smul.addr %s157, 8
        %s161 = sadd.s32 %s159, %s160
        %s162 = smul.addr %s161, 8
        %s163 = scalar_lea.vmem %s0, %s162
        %s164 = smul.u32 2, %s17
      $region20: #{tpu_custom_call.1} parent=15 // pred_fallthru
        _
      // Predicated region
      $region21: #{tpu_custom_call.1} parent=15 // pred_check
        %p165 = pneg %p71
      $region22: #{tpu_custom_call.1} parent=15 // pred_check_branch
        %167 = sbr.rel (%p165) target = $region24
      $region23: #{tpu_custom_call.1} parent=15 // pred_region
        %s168 = smul.u32 2, %s17
        %p169 = scmp.lt.s32.totalorder %s16, 1
        %s170 = scalar_select %p169, %s16, 1
        %p171 = scmp.lt.s32.totalorder %s168, 1
        %s172 = scalar_select %p171, %s168, 1
        %s173 = smul.addr %s170, 36
        %s174 = sadd.s32 %s172, %s173
        %s175 = smul.addr %s174, 8
        %s176 = scalar_lea.vmem %s1, %s175
        %s177 = smul.u32 2, %s17
      $region24: #{tpu_custom_call.1} parent=15 // pred_fallthru
        _
      // Predicated region
      $region25: #{tpu_custom_call.1} parent=15 // pred_check
        %p178 = pneg %p99
      $region26: #{tpu_custom_call.1} parent=15 // pred_check_branch
        %180 = sbr.rel (%p178) target = $region28
      $region27: #{tpu_custom_call.1} parent=15 // pred_region
        %s181 = smul.u32 2, %s17
        %p182 = scmp.lt.s32.totalorder %s16, 1
        %s183 = scalar_select %p182, %s16, 1
        %p184 = scmp.lt.s32.totalorder %s181, 1
        %s185 = scalar_select %p184, %s181, 1
        %s186 = smul.addr %s183, 4
        %s187 = sadd.s32 %s185, %s186
        %s188 = smul.addr %s187, 8
        %s189 = scalar_lea.vmem %s2, %s188
        %s190 = smul.u32 2, %s17
      $region28: #{tpu_custom_call.1} parent=15 // pred_fallthru
        _
    $region16: #{tpu_custom_call.1} parent=5 // pred_fallthru
      _
    %p191 = scmp.le.s32.totalorder 1, %s9
    %p192 = scmp.lt.s32.totalorder %s9, 3
    %p193 = pnand %p191, %p192
    %p194 = pneg %p193
    // Predicated region
    $region29: #{tpu_custom_call.1} parent=5 // pred_check
      _
    $region30: #{tpu_custom_call.1} parent=5 // pred_check_branch
      %196 = sbr.rel (%p193) target = $region32
    $region31: #{tpu_custom_call.1} parent=5 // pred_region
      %s197 = ssub.s32 %s9, 1
      %s198 = smul.u32 2, %s19
      %p199 = scmp.lt.s32.totalorder %s18, 1
      %s200 = scalar_select %p199, %s18, 1
      %p201 = scmp.lt.s32.totalorder %s198, 1
      %s202 = scalar_select %p201, %s198, 1
      %s203 = smul.addr %s200, 8
      %s204 = sadd.s32 %s202, %s203
      %s205 = smul.addr %s204, 8
      %s206 = scalar_lea.vmem %s0, %s205
      %p207 = pneg %p49
      %p208 = pneg %p46
      %s209 = smul.u32 2, %s19
      %p210 = scmp.lt.s32.totalorder %s18, 1
      %s211 = scalar_select %p210, %s18, 1
      %p212 = scmp.lt.s32.totalorder %s209, 1
      %s213 = scalar_select %p212, %s209, 1
      %s214 = smul.addr %s211, 36
      %s215 = sadd.s32 %s213, %s214
      %s216 = smul.addr %s215, 8
      %s217 = scalar_lea.vmem %s1, %s216
      %p218 = pneg %p77
      %p219 = pneg %p74
      %s220 = smul.u32 2, %s19
      %p221 = scmp.lt.s32.totalorder %s18, 1
      %s222 = scalar_select %p221, %s18, 1
      %p223 = scmp.lt.s32.totalorder %s220, 1
      %s224 = scalar_select %p223, %s220, 1
      %s225 = smul.addr %s222, 4
      %s226 = sadd.s32 %s224, %s225
      %s227 = smul.addr %s226, 8
      %s228 = scalar_lea.vmem %s2, %s227
      %p229 = pneg %p105
      %p230 = pneg %p102
      %p231 = pneg %p133
      %p232 = pneg %p130
      %s233 = smul.u32 2, %s19
      %p234 = scmp.lt.s32.totalorder %s18, 1
      %s235 = scalar_select %p234, %s18, 1
      %p236 = scmp.lt.s32.totalorder %s233, 1
      %s237 = scalar_select %p236, %s233, 1
      %s238 = smul.addr %s235, 8
      %s239 = sadd.s32 %s237, %s238
      %s240 = smul.addr %s239, 8
      %s241 = scalar_lea.vmem %s3, %s240
      %s242 = smul.u32 2, %s19
      %p243 = scmp.lt.s32.totalorder %s18, 1
      %s244 = scalar_select %p243, %s18, 1
      %p245 = scmp.lt.s32.totalorder %s242, 1
      %s246 = scalar_select %p245, %s242, 1
      %s247 = smul.addr %s244, 8
      %s248 = sadd.s32 %s246, %s247
      %s249 = smul.addr %s248, 8
      %s250 = scalar_lea.vmem %s0, %s249
      %s251 = smul.u32 2, %s19
      %s252 = smul.u32 2, %s19
      %p253 = scmp.lt.s32.totalorder %s18, 1
      %s254 = scalar_select %p253, %s18, 1
      %p255 = scmp.lt.s32.totalorder %s252, 1
      %s256 = scalar_select %p255, %s252, 1
      %s257 = smul.addr %s254, 36
      %s258 = sadd.s32 %s256, %s257
      %s259 = smul.addr %s258, 8
      %s260 = scalar_lea.vmem %s1, %s259
      %s261 = smul.u32 2, %s19
      %s262 = smul.u32 2, %s19
      %p263 = scmp.lt.s32.totalorder %s18, 1
      %s264 = scalar_select %p263, %s18, 1
      %p265 = scmp.lt.s32.totalorder %s262, 1
      %s266 = scalar_select %p265, %s262, 1
      %s267 = smul.addr %s264, 4
      %s268 = sadd.s32 %s266, %s267
      %s269 = smul.addr %s268, 8
      %s270 = scalar_lea.vmem %s2, %s269
      %s271 = smul.u32 2, %s19
      %s272 = smul.u32 2, %s19
      %p273 = scmp.lt.s32.totalorder %s18, 1
      %s274 = scalar_select %p273, %s18, 1
      %p275 = scmp.lt.s32.totalorder %s272, 1
      %s276 = scalar_select %p275, %s272, 1
      %s277 = smul.addr %s274, 8
      %s278 = sadd.s32 %s276, %s277
      %s279 = smul.addr %s278, 8
      %s280 = scalar_lea.vmem %s3, %s279
      %s281 = smul.u32 2, %s19
      %v282 = vld [vmem:[%s270] sm:$0xff]
      %v283 = vld [vmem:[%s270 + $0x8] sm:$0xff]
      %v284 = vld [vmem:[%s270 + $0x10] sm:$0x1]
      %v285 = vld [vmem:[%s270 + $0x18] sm:$0x1]
      %v286 = vld [vmem:[%s250] sm:$0xff]
      %v287 = vld [vmem:[%s250 + $0x8] sm:$0xff]
      %v288 = vld [vmem:[%s250 + $0x10] sm:$0x1]
      %v289 = vld [vmem:[%s250 + $0x18] sm:$0x1]
      %vm290 = vcmask 1040384
      %v291 = vsel %vm290, %v288, -inf
      %v292 = vmax.f32 %v286, %v291
      %v293 = vrot.slane %v292, 4
      %v294 = vmax.f32 %v292, %v293
      %v295 = vrot.slane %v294, 2
      %v296 = vmax.f32 %v294, %v295
      %v297 = vrot.slane %v296, 1
      %v298 = vmax.f32 %v296, %v297
      %v299 = vsel %vm290, %v289, -inf
      %v300 = vmax.f32 %v287, %v299
      %v301 = vrot.slane %v300, 4
      %v302 = vmax.f32 %v300, %v301
      %v303 = vrot.slane %v302, 2
      %v304 = vmax.f32 %v302, %v303
      %v305 = vrot.slane %v304, 1
      %v306 = vmax.f32 %v304, %v305
      %v307 = vsub.f32 %v286, %v298
      %v308 = vsub.f32 %v287, %v306
      %v309 = vsub.f32 %v288, %v298
      %v310 = vsub.f32 %v289, %v306
      %v311 = vmul.f32 %v307, 1.442695
      %v312 = vpow.pop %v311
      %v313 = vmul.f32 %v308, 1.442695
      %v314 = vpow.pop %v313
      %v315 = vmul.f32 %v309, 1.442695
      %v316 = vpow.pop %v315
      %v317 = vmul.f32 %v310, 1.442695
      %v318 = vpow.pop %v317
      %v319 = vld [vmem:[%s260] sm:$0xff]
      %v320 = vld [vmem:[%s260 + $0x8] sm:$0xff]
      %v321 = vld [vmem:[%s260 + $0x10] sm:$0x1]
      %v322 = vld [vmem:[%s260 + $0x18] sm:$0x1]
      %v323 = vmul.f32 %v319, %v312
      %v324 = vmul.f32 %v320, %v314
      %v325 = vmul.f32 %v321, %v316
      %v326 = vmul.f32 %v322, %v318
      %v327 = vsel %vm290, %v325, 0.0
      %v328 = vadd.f32 %v323, %v327
      %v329 = vrot.slane %v328, 4
      %v330 = vadd.f32 %v328, %v329
      %v331 = vrot.slane %v330, 2
      %v332 = vadd.f32 %v330, %v331
      %v333 = vrot.slane %v332, 1
      %v334 = vadd.f32 %v332, %v333
      %v335 = vsel %vm290, %v326, 0.0
      %v336 = vadd.f32 %v324, %v335
      %v337 = vrot.slane %v336, 4
      %v338 = vadd.f32 %v336, %v337
      %v339 = vrot.slane %v338, 2
      %v340 = vadd.f32 %v338, %v339
      %v341 = vrot.slane %v340, 1
      %v342 = vadd.f32 %v340, %v341
      %v343 = vadd.f32 %v334, 1e-10
      %v344 = vadd.f32 %v342, 1e-10
      %v345 = vrcp.pop %v343
      %v346 = vrcp.pop %v344
      %v347 = vmul.f32 %v343, %v345
      %v348 = vmul.f32 %v344, %v346
      %v349 = vsub.f32 2.0, %v347
      %v350 = vsub.f32 2.0, %v348
      %v351 = vmul.f32 %v345, %v349
      %v352 = vmul.f32 %v346, %v350
      %v353 = vmul.f32 %v282, %v351
      %v354 = vmul.f32 %v283, %v352
      %v355 = vlaneseq
      %v356 = vshrl.u32 %v355, 7
      %v357 = vsub.s32 0, %v356
      %v358 = vrot.slane %v353, %v357
      %v359 = vlaneseq
      %v360 = vshrl.u32 %v359, 7
      %v361 = vsub.s32 0, %v360
      %v362 = vrot.slane %v354, %v361
      %v363 = vmul.f32 %v358, %v323
      %v364 = vmul.f32 %v362, %v324
      %v365 = vmul.f32 %v358, %v325
      %v366 = vmul.f32 %v362, %v326
      %v367 = vadd.f32 %v363, 0.0
      %v368 = vadd.f32 %v364, 0.0
      %v369 = vadd.f32 %v365, 0.0
      %v370 = vadd.f32 %v366, 0.0
      %s371 = scalar_lea.vmem %s260, 32
      %v372 = vld [vmem:[%s371] sm:$0xff]
      %v373 = vld [vmem:[%s371 + $0x8] sm:$0xff]
      %v374 = vld [vmem:[%s371 + $0x10] sm:$0x1]
      %v375 = vld [vmem:[%s371 + $0x18] sm:$0x1]
      %v376 = vmul.f32 %v372, %v312
      %v377 = vmul.f32 %v373, %v314
      %v378 = vmul.f32 %v374, %v316
      %v379 = vmul.f32 %v375, %v318
      %v380 = vsel %vm290, %v378, 0.0
      %v381 = vadd.f32 %v376, %v380
      %v382 = vrot.slane %v381, 4
      %v383 = vadd.f32 %v381, %v382
      %v384 = vrot.slane %v383, 2
      %v385 = vadd.f32 %v383, %v384
      %v386 = vrot.slane %v385, 1
      %v387 = vadd.f32 %v385, %v386
      %v388 = vsel %vm290, %v379, 0.0
      %v389 = vadd.f32 %v377, %v388
      %v390 = vrot.slane %v389, 4
      %v391 = vadd.f32 %v389, %v390
      %v392 = vrot.slane %v391, 2
      %v393 = vadd.f32 %v391, %v392
      %v394 = vrot.slane %v393, 1
      %v395 = vadd.f32 %v393, %v394
      %v396 = vadd.f32 %v387, 1e-10
      %v397 = vadd.f32 %v395, 1e-10
      %v398 = vrcp.pop %v396
      %v399 = vrcp.pop %v397
      %v400 = vmul.f32 %v396, %v398
      %v401 = vmul.f32 %v397, %v399
      %v402 = vsub.f32 2.0, %v400
      %v403 = vsub.f32 2.0, %v401
      %v404 = vmul.f32 %v398, %v402
      %v405 = vmul.f32 %v399, %v403
      %v406 = vmul.f32 %v282, %v404
      %v407 = vmul.f32 %v283, %v405
      %v408 = vlaneseq
      %v409 = vshrl.u32 %v408, 7
      %v410 = vsub.s32 1, %v409
      %v411 = vrot.slane %v406, %v410
      %v412 = vlaneseq
      %v413 = vshrl.u32 %v412, 7
      %v414 = vsub.s32 1, %v413
      %v415 = vrot.slane %v407, %v414
      %v416 = vmul.f32 %v411, %v376
      %v417 = vmul.f32 %v415, %v377
      %v418 = vmul.f32 %v411, %v378
      %v419 = vmul.f32 %v415, %v379
      %v420 = vadd.f32 %v367, %v416
      %v421 = vadd.f32 %v368, %v417
      %v422 = vadd.f32 %v369, %v418
      %v423 = vadd.f32 %v370, %v419
      %s424 = scalar_lea.vmem %s260, 64
      %v425 = vld [vmem:[%s424] sm:$0xff]
      %v426 = vld [vmem:[%s424 + $0x8] sm:$0xff]
      %v427 = vld [vmem:[%s424 + $0x10] sm:$0x1]
      %v428 = vld [vmem:[%s424 + $0x18] sm:$0x1]
      %v429 = vmul.f32 %v425, %v312
      %v430 = vmul.f32 %v426, %v314
      %v431 = vmul.f32 %v427, %v316
      %v432 = vmul.f32 %v428, %v318
      %v433 = vsel %vm290, %v431, 0.0
      %v434 = vadd.f32 %v429, %v433
      %v435 = vrot.slane %v434, 4
      %v436 = vadd.f32 %v434, %v435
      %v437 = vrot.slane %v436, 2
      %v438 = vadd.f32 %v436, %v437
      %v439 = vrot.slane %v438, 1
      %v440 = vadd.f32 %v438, %v439
      %v441 = vsel %vm290, %v432, 0.0
      %v442 = vadd.f32 %v430, %v441
      %v443 = vrot.slane %v442, 4
      %v444 = vadd.f32 %v442, %v443
      %v445 = vrot.slane %v444, 2
      %v446 = vadd.f32 %v444, %v445
      %v447 = vrot.slane %v446, 1
      %v448 = vadd.f32 %v446, %v447
      %v449 = vadd.f32 %v440, 1e-10
      %v450 = vadd.f32 %v448, 1e-10
      %v451 = vrcp.pop %v449
      %v452 = vrcp.pop %v450
      %v453 = vmul.f32 %v449, %v451
      %v454 = vmul.f32 %v450, %v452
      %v455 = vsub.f32 2.0, %v453
      %v456 = vsub.f32 2.0, %v454
      %v457 = vmul.f32 %v451, %v455
      %v458 = vmul.f32 %v452, %v456
      %v459 = vmul.f32 %v282, %v457
      %v460 = vmul.f32 %v283, %v458
      %v461 = vlaneseq
      %v462 = vshrl.u32 %v461, 7
      %v463 = vsub.s32 2, %v462
      %v464 = vrot.slane %v459, %v463
      %v465 = vlaneseq
      %v466 = vshrl.u32 %v465, 7
      %v467 = vsub.s32 2, %v466
      %v468 = vrot.slane %v460, %v467
      %v469 = vmul.f32 %v464, %v429
      %v470 = vmul.f32 %v468, %v430
      %v471 = vmul.f32 %v464, %v431
      %v472 = vmul.f32 %v468, %v432
      %v473 = vadd.f32 %v420, %v469
      %v474 = vadd.f32 %v421, %v470
      %v475 = vadd.f32 %v422, %v471
      %v476 = vadd.f32 %v423, %v472
      %s477 = scalar_lea.vmem %s260, 96
      %v478 = vld [vmem:[%s477] sm:$0xff]
      %v479 = vld [vmem:[%s477 + $0x8] sm:$0xff]
      %v480 = vld [vmem:[%s477 + $0x10] sm:$0x1]
      %v481 = vld [vmem:[%s477 + $0x18] sm:$0x1]
      %v482 = vmul.f32 %v478, %v312
      %v483 = vmul.f32 %v479, %v314
      %v484 = vmul.f32 %v480, %v316
      %v485 = vmul.f32 %v481, %v318
      %v486 = vsel %vm290, %v484, 0.0
      %v487 = vadd.f32 %v482, %v486
      %v488 = vrot.slane %v487, 4
      %v489 = vadd.f32 %v487, %v488
      %v490 = vrot.slane %v489, 2
      %v491 = vadd.f32 %v489, %v490
      %v492 = vrot.slane %v491, 1
      %v493 = vadd.f32 %v491, %v492
      %v494 = vsel %vm290, %v485, 0.0
      %v495 = vadd.f32 %v483, %v494
      %v496 = vrot.slane %v495, 4
      %v497 = vadd.f32 %v495, %v496
      %v498 = vrot.slane %v497, 2
      %v499 = vadd.f32 %v497, %v498
      %v500 = vrot.slane %v499, 1
      %v501 = vadd.f32 %v499, %v500
      %v502 = vadd.f32 %v493, 1e-10
      %v503 = vadd.f32 %v501, 1e-10
      %v504 = vrcp.pop %v502
      %v505 = vrcp.pop %v503
      %v506 = vmul.f32 %v502, %v504
      %v507 = vmul.f32 %v503, %v505
      %v508 = vsub.f32 2.0, %v506
      %v509 = vsub.f32 2.0, %v507
      %v510 = vmul.f32 %v504, %v508
      %v511 = vmul.f32 %v505, %v509
      %v512 = vmul.f32 %v282, %v510
      %v513 = vmul.f32 %v283, %v511
      %v514 = vlaneseq
      %v515 = vshrl.u32 %v514, 7
      %v516 = vsub.s32 3, %v515
      %v517 = vrot.slane %v512, %v516
      %v518 = vlaneseq
      %v519 = vshrl.u32 %v518, 7
      %v520 = vsub.s32 3, %v519
      %v521 = vrot.slane %v513, %v520
      %v522 = vmul.f32 %v517, %v482
      %v523 = vmul.f32 %v521, %v483
      %v524 = vmul.f32 %v517, %v484
      %v525 = vmul.f32 %v521, %v485
      %v526 = vadd.f32 %v473, %v522
      %v527 = vadd.f32 %v474, %v523
      %v528 = vadd.f32 %v475, %v524
      %v529 = vadd.f32 %v476, %v525
      %s530 = scalar_lea.vmem %s260, 128
      %v531 = vld [vmem:[%s530] sm:$0xff]
      %v532 = vld [vmem:[%s530 + $0x8] sm:$0xff]
      %v533 = vld [vmem:[%s530 + $0x10] sm:$0x1]
      %v534 = vld [vmem:[%s530 + $0x18] sm:$0x1]
      %v535 = vmul.f32 %v531, %v312
      %v536 = vmul.f32 %v532, %v314
      %v537 = vmul.f32 %v533, %v316
      %v538 = vmul.f32 %v534, %v318
      %v539 = vsel %vm290, %v537, 0.0
      %v540 = vadd.f32 %v535, %v539
      %v541 = vrot.slane %v540, 4
      %v542 = vadd.f32 %v540, %v541
      %v543 = vrot.slane %v542, 2
      %v544 = vadd.f32 %v542, %v543
      %v545 = vrot.slane %v544, 1
      %v546 = vadd.f32 %v544, %v545
      %v547 = vsel %vm290, %v538, 0.0
      %v548 = vadd.f32 %v536, %v547
      %v549 = vrot.slane %v548, 4
      %v550 = vadd.f32 %v548, %v549
      %v551 = vrot.slane %v550, 2
      %v552 = vadd.f32 %v550, %v551
      %v553 = vrot.slane %v552, 1
      %v554 = vadd.f32 %v552, %v553
      %v555 = vadd.f32 %v546, 1e-10
      %v556 = vadd.f32 %v554, 1e-10
      %v557 = vrcp.pop %v555
      %v558 = vrcp.pop %v556
      %v559 = vmul.f32 %v555, %v557
      %v560 = vmul.f32 %v556, %v558
      %v561 = vsub.f32 2.0, %v559
      %v562 = vsub.f32 2.0, %v560
      %v563 = vmul.f32 %v557, %v561
      %v564 = vmul.f32 %v558, %v562
      %v565 = vmul.f32 %v282, %v563
      %v566 = vmul.f32 %v283, %v564
      %v567 = vlaneseq
      %v568 = vshrl.u32 %v567, 7
      %v569 = vsub.s32 4, %v568
      %v570 = vrot.slane %v565, %v569
      %v571 = vlaneseq
      %v572 = vshrl.u32 %v571, 7
      %v573 = vsub.s32 4, %v572
      %v574 = vrot.slane %v566, %v573
      %v575 = vmul.f32 %v570, %v535
      %v576 = vmul.f32 %v574, %v536
      %v577 = vmul.f32 %v570, %v537
      %v578 = vmul.f32 %v574, %v538
      %v579 = vadd.f32 %v526, %v575
      %v580 = vadd.f32 %v527, %v576
      %v581 = vadd.f32 %v528, %v577
      %v582 = vadd.f32 %v529, %v578
      %s583 = scalar_lea.vmem %s260, 160
      %v584 = vld [vmem:[%s583] sm:$0xff]
      %v585 = vld [vmem:[%s583 + $0x8] sm:$0xff]
      %v586 = vld [vmem:[%s583 + $0x10] sm:$0x1]
      %v587 = vld [vmem:[%s583 + $0x18] sm:$0x1]
      %v588 = vmul.f32 %v584, %v312
      %v589 = vmul.f32 %v585, %v314
      %v590 = vmul.f32 %v586, %v316
      %v591 = vmul.f32 %v587, %v318
      %v592 = vsel %vm290, %v590, 0.0
      %v593 = vadd.f32 %v588, %v592
      %v594 = vrot.slane %v593, 4
      %v595 = vadd.f32 %v593, %v594
      %v596 = vrot.slane %v595, 2
      %v597 = vadd.f32 %v595, %v596
      %v598 = vrot.slane %v597, 1
      %v599 = vadd.f32 %v597, %v598
      %v600 = vsel %vm290, %v591, 0.0
      %v601 = vadd.f32 %v589, %v600
      %v602 = vrot.slane %v601, 4
      %v603 = vadd.f32 %v601, %v602
      %v604 = vrot.slane %v603, 2
      %v605 = vadd.f32 %v603, %v604
      %v606 = vrot.slane %v605, 1
      %v607 = vadd.f32 %v605, %v606
      %v608 = vadd.f32 %v599, 1e-10
      %v609 = vadd.f32 %v607, 1e-10
      %v610 = vrcp.pop %v608
      %v611 = vrcp.pop %v609
      %v612 = vmul.f32 %v608, %v610
      %v613 = vmul.f32 %v609, %v611
      %v614 = vsub.f32 2.0, %v612
      %v615 = vsub.f32 2.0, %v613
      %v616 = vmul.f32 %v610, %v614
      %v617 = vmul.f32 %v611, %v615
      %v618 = vmul.f32 %v282, %v616
      %v619 = vmul.f32 %v283, %v617
      %v620 = vlaneseq
      %v621 = vshrl.u32 %v620, 7
      %v622 = vsub.s32 5, %v621
      %v623 = vrot.slane %v618, %v622
      %v624 = vlaneseq
      %v625 = vshrl.u32 %v624, 7
      %v626 = vsub.s32 5, %v625
      %v627 = vrot.slane %v619, %v626
      %v628 = vmul.f32 %v623, %v588
      %v629 = vmul.f32 %v627, %v589
      %v630 = vmul.f32 %v623, %v590
      %v631 = vmul.f32 %v627, %v591
      %v632 = vadd.f32 %v579, %v628
      %v633 = vadd.f32 %v580, %v629
      %v634 = vadd.f32 %v581, %v630
      %v635 = vadd.f32 %v582, %v631
      %s636 = scalar_lea.vmem %s260, 192
      %v637 = vld [vmem:[%s636] sm:$0xff]
      %v638 = vld [vmem:[%s636 + $0x8] sm:$0xff]
      %v639 = vld [vmem:[%s636 + $0x10] sm:$0x1]
      %v640 = vld [vmem:[%s636 + $0x18] sm:$0x1]
      %v641 = vmul.f32 %v637, %v312
      %v642 = vmul.f32 %v638, %v314
      %v643 = vmul.f32 %v639, %v316
      %v644 = vmul.f32 %v640, %v318
      %v645 = vsel %vm290, %v643, 0.0
      %v646 = vadd.f32 %v641, %v645
      %v647 = vrot.slane %v646, 4
      %v648 = vadd.f32 %v646, %v647
      %v649 = vrot.slane %v648, 2
      %v650 = vadd.f32 %v648, %v649
      %v651 = vrot.slane %v650, 1
      %v652 = vadd.f32 %v650, %v651
      %v653 = vsel %vm290, %v644, 0.0
      %v654 = vadd.f32 %v642, %v653
      %v655 = vrot.slane %v654, 4
      %v656 = vadd.f32 %v654, %v655
      %v657 = vrot.slane %v656, 2
      %v658 = vadd.f32 %v656, %v657
      %v659 = vrot.slane %v658, 1
      %v660 = vadd.f32 %v658, %v659
      %v661 = vadd.f32 %v652, 1e-10
      %v662 = vadd.f32 %v660, 1e-10
      %v663 = vrcp.pop %v661
      %v664 = vrcp.pop %v662
      %v665 = vmul.f32 %v661, %v663
      %v666 = vmul.f32 %v662, %v664
      %v667 = vsub.f32 2.0, %v665
      %v668 = vsub.f32 2.0, %v666
      %v669 = vmul.f32 %v663, %v667
      %v670 = vmul.f32 %v664, %v668
      %v671 = vmul.f32 %v282, %v669
      %v672 = vmul.f32 %v283, %v670
      %v673 = vlaneseq
      %v674 = vshrl.u32 %v673, 7
      %v675 = vsub.s32 6, %v674
      %v676 = vrot.slane %v671, %v675
      %v677 = vlaneseq
      %v678 = vshrl.u32 %v677, 7
      %v679 = vsub.s32 6, %v678
      %v680 = vrot.slane %v672, %v679
      %v681 = vmul.f32 %v676, %v641
      %v682 = vmul.f32 %v680, %v642
      %v683 = vmul.f32 %v676, %v643
      %v684 = vmul.f32 %v680, %v644
      %v685 = vadd.f32 %v632, %v681
      %v686 = vadd.f32 %v633, %v682
      %v687 = vadd.f32 %v634, %v683
      %v688 = vadd.f32 %v635, %v684
      %s689 = scalar_lea.vmem %s260, 224
      %v690 = vld [vmem:[%s689] sm:$0xff]
      %v691 = vld [vmem:[%s689 + $0x8] sm:$0xff]
      %v692 = vld [vmem:[%s689 + $0x10] sm:$0x1]
      %v693 = vld [vmem:[%s689 + $0x18] sm:$0x1]
      %v694 = vmul.f32 %v690, %v312
      %v695 = vmul.f32 %v691, %v314
      %v696 = vmul.f32 %v692, %v316
      %v697 = vmul.f32 %v693, %v318
      %v698 = vsel %vm290, %v696, 0.0
      %v699 = vadd.f32 %v694, %v698
      %v700 = vrot.slane %v699, 4
      %v701 = vadd.f32 %v699, %v700
      %v702 = vrot.slane %v701, 2
      %v703 = vadd.f32 %v701, %v702
      %v704 = vrot.slane %v703, 1
      %v705 = vadd.f32 %v703, %v704
      %v706 = vsel %vm290, %v697, 0.0
      %v707 = vadd.f32 %v695, %v706
      %v708 = vrot.slane %v707, 4
      %v709 = vadd.f32 %v707, %v708
      %v710 = vrot.slane %v709, 2
      %v711 = vadd.f32 %v709, %v710
      %v712 = vrot.slane %v711, 1
      %v713 = vadd.f32 %v711, %v712
      %v714 = vadd.f32 %v705, 1e-10
      %v715 = vadd.f32 %v713, 1e-10
      %v716 = vrcp.pop %v714
      %v717 = vrcp.pop %v715
      %v718 = vmul.f32 %v714, %v716
      %v719 = vmul.f32 %v715, %v717
      %v720 = vsub.f32 2.0, %v718
      %v721 = vsub.f32 2.0, %v719
      %v722 = vmul.f32 %v716, %v720
      %v723 = vmul.f32 %v717, %v721
      %v724 = vmul.f32 %v282, %v722
      %v725 = vmul.f32 %v283, %v723
      %v726 = vlaneseq
      %v727 = vshrl.u32 %v726, 7
      %v728 = vsub.s32 7, %v727
      %v729 = vrot.slane %v724, %v728
      %v730 = vlaneseq
      %v731 = vshrl.u32 %v730, 7
      %v732 = vsub.s32 7, %v731
      %v733 = vrot.slane %v725, %v732
      %v734 = vmul.f32 %v729, %v694
      %v735 = vmul.f32 %v733, %v695
      %v736 = vmul.f32 %v729, %v696
      %v737 = vmul.f32 %v733, %v697
      %v738 = vadd.f32 %v685, %v734
      %v739 = vadd.f32 %v686, %v735
      %v740 = vadd.f32 %v687, %v736
      %v741 = vadd.f32 %v688, %v737
      %s742 = scalar_lea.vmem %s260, 256
      %v743 = vld [vmem:[%s742] sm:$0xff]
      %v744 = vld [vmem:[%s742 + $0x8] sm:$0xff]
      %v745 = vld [vmem:[%s742 + $0x10] sm:$0x1]
      %v746 = vld [vmem:[%s742 + $0x18] sm:$0x1]
      %v747 = vmul.f32 %v743, %v312
      %v748 = vmul.f32 %v744, %v314
      %v749 = vmul.f32 %v745, %v316
      %v750 = vmul.f32 %v746, %v318
      %v751 = vsel %vm290, %v749, 0.0
      %v752 = vadd.f32 %v747, %v751
      %v753 = vrot.slane %v752, 4
      %v754 = vadd.f32 %v752, %v753
      %v755 = vrot.slane %v754, 2
      %v756 = vadd.f32 %v754, %v755
      %v757 = vrot.slane %v756, 1
      %v758 = vadd.f32 %v756, %v757
      %v759 = vsel %vm290, %v750, 0.0
      %v760 = vadd.f32 %v748, %v759
      %v761 = vrot.slane %v760, 4
      %v762 = vadd.f32 %v760, %v761
      %v763 = vrot.slane %v762, 2
      %v764 = vadd.f32 %v762, %v763
      %v765 = vrot.slane %v764, 1
      %v766 = vadd.f32 %v764, %v765
      %v767 = vadd.f32 %v758, 1e-10
      %v768 = vadd.f32 %v766, 1e-10
      %v769 = vrcp.pop %v767
      %v770 = vrcp.pop %v768
      %v771 = vmul.f32 %v767, %v769
      %v772 = vmul.f32 %v768, %v770
      %v773 = vsub.f32 2.0, %v771
      %v774 = vsub.f32 2.0, %v772
      %v775 = vmul.f32 %v769, %v773
      %v776 = vmul.f32 %v770, %v774
      %v777 = vmul.f32 %v284, %v775
      %v778 = vmul.f32 %v285, %v776
      %v779 = vlaneseq
      %v780 = vshrl.u32 %v779, 7
      %v781 = vsub.s32 0, %v780
      %v782 = vrot.slane %v777, %v781
      %v783 = vlaneseq
      %v784 = vshrl.u32 %v783, 7
      %v785 = vsub.s32 0, %v784
      %v786 = vrot.slane %v778, %v785
      %v787 = vmul.f32 %v782, %v747
      %v788 = vmul.f32 %v786, %v748
      %v789 = vmul.f32 %v782, %v749
      %v790 = vmul.f32 %v786, %v750
      %v791 = vadd.f32 %v738, %v787
      %v792 = vadd.f32 %v739, %v788
      %v793 = vadd.f32 %v740, %v789
      %v794 = vadd.f32 %v741, %v790
      %795 = vst [vmem:[%s280] sm:$0xff] %v791
      %796 = vst [vmem:[%s280 + $0x8] sm:$0xff] %v792
      %797 = vst [vmem:[%s280 + $0x10] sm:$0x1] %v793
      %798 = vst [vmem:[%s280 + $0x18] sm:$0x1] %v794
      %s799 = scalar_lea.vmem %s250, 32
      %v800 = vld [vmem:[%s799] sm:$0xff]
      %v801 = vld [vmem:[%s799 + $0x8] sm:$0xff]
      %v802 = vld [vmem:[%s799 + $0x10] sm:$0x1]
      %v803 = vld [vmem:[%s799 + $0x18] sm:$0x1]
      %v804 = vsel %vm290, %v802, -inf
      %v805 = vmax.f32 %v800, %v804
      %v806 = vrot.slane %v805, 4
      %v807 = vmax.f32 %v805, %v806
      %v808 = vrot.slane %v807, 2
      %v809 = vmax.f32 %v807, %v808
      %v810 = vrot.slane %v809, 1
      %v811 = vmax.f32 %v809, %v810
      %v812 = vsel %vm290, %v803, -inf
      %v813 = vmax.f32 %v801, %v812
      %v814 = vrot.slane %v813, 4
      %v815 = vmax.f32 %v813, %v814
      %v816 = vrot.slane %v815, 2
      %v817 = vmax.f32 %v815, %v816
      %v818 = vrot.slane %v817, 1
      %v819 = vmax.f32 %v817, %v818
      %v820 = vsub.f32 %v800, %v811
      %v821 = vsub.f32 %v801, %v819
      %v822 = vsub.f32 %v802, %v811
      %v823 = vsub.f32 %v803, %v819
      %v824 = vmul.f32 %v820, 1.442695
      %v825 = vpow.pop %v824
      %v826 = vmul.f32 %v821, 1.442695
      %v827 = vpow.pop %v826
      %v828 = vmul.f32 %v822, 1.442695
      %v829 = vpow.pop %v828
      %v830 = vmul.f32 %v823, 1.442695
      %v831 = vpow.pop %v830
      %v832 = vld [vmem:[%s260] sm:$0xff]
      %v833 = vld [vmem:[%s260 + $0x8] sm:$0xff]
      %v834 = vld [vmem:[%s260 + $0x10] sm:$0x1]
      %v835 = vld [vmem:[%s260 + $0x18] sm:$0x1]
      %v836 = vmul.f32 %v832, %v825
      %v837 = vmul.f32 %v833, %v827
      %v838 = vmul.f32 %v834, %v829
      %v839 = vmul.f32 %v835, %v831
      %v840 = vsel %vm290, %v838, 0.0
      %v841 = vadd.f32 %v836, %v840
      %v842 = vrot.slane %v841, 4
      %v843 = vadd.f32 %v841, %v842
      %v844 = vrot.slane %v843, 2
      %v845 = vadd.f32 %v843, %v844
      %v846 = vrot.slane %v845, 1
      %v847 = vadd.f32 %v845, %v846
      %v848 = vsel %vm290, %v839, 0.0
      %v849 = vadd.f32 %v837, %v848
      %v850 = vrot.slane %v849, 4
      %v851 = vadd.f32 %v849, %v850
      %v852 = vrot.slane %v851, 2
      %v853 = vadd.f32 %v851, %v852
      %v854 = vrot.slane %v853, 1
      %v855 = vadd.f32 %v853, %v854
      %v856 = vadd.f32 %v847, 1e-10
      %v857 = vadd.f32 %v855, 1e-10
      %v858 = vrcp.pop %v856
      %v859 = vrcp.pop %v857
      %v860 = vmul.f32 %v856, %v858
      %v861 = vmul.f32 %v857, %v859
      %v862 = vsub.f32 2.0, %v860
      %v863 = vsub.f32 2.0, %v861
      %v864 = vmul.f32 %v858, %v862
      %v865 = vmul.f32 %v859, %v863
      %v866 = vmul.f32 %v282, %v864
      %v867 = vmul.f32 %v283, %v865
      %v868 = vlaneseq
      %v869 = vshrl.u32 %v868, 7
      %v870 = vsub.s32 0, %v869
      %v871 = vrot.slane %v866, %v870
      %v872 = vlaneseq
      %v873 = vshrl.u32 %v872, 7
      %v874 = vsub.s32 0, %v873
      %v875 = vrot.slane %v867, %v874
      %v876 = vmul.f32 %v871, %v836
      %v877 = vmul.f32 %v875, %v837
      %v878 = vmul.f32 %v871, %v838
      %v879 = vmul.f32 %v875, %v839
      %v880 = vadd.f32 %v876, 0.0
      %v881 = vadd.f32 %v877, 0.0
      %v882 = vadd.f32 %v878, 0.0
      %v883 = vadd.f32 %v879, 0.0
      %v884 = vld [vmem:[%s371] sm:$0xff]
      %v885 = vld [vmem:[%s371 + $0x8] sm:$0xff]
      %v886 = vld [vmem:[%s371 + $0x10] sm:$0x1]
      %v887 = vld [vmem:[%s371 + $0x18] sm:$0x1]
      %v888 = vmul.f32 %v884, %v825
      %v889 = vmul.f32 %v885, %v827
      %v890 = vmul.f32 %v886, %v829
      %v891 = vmul.f32 %v887, %v831
      %v892 = vsel %vm290, %v890, 0.0
      %v893 = vadd.f32 %v888, %v892
      %v894 = vrot.slane %v893, 4
      %v895 = vadd.f32 %v893, %v894
      %v896 = vrot.slane %v895, 2
      %v897 = vadd.f32 %v895, %v896
      %v898 = vrot.slane %v897, 1
      %v899 = vadd.f32 %v897, %v898
      %v900 = vsel %vm290, %v891, 0.0
      %v901 = vadd.f32 %v889, %v900
      %v902 = vrot.slane %v901, 4
      %v903 = vadd.f32 %v901, %v902
      %v904 = vrot.slane %v903, 2
      %v905 = vadd.f32 %v903, %v904
      %v906 = vrot.slane %v905, 1
      %v907 = vadd.f32 %v905, %v906
      %v908 = vadd.f32 %v899, 1e-10
      %v909 = vadd.f32 %v907, 1e-10
      %v910 = vrcp.pop %v908
      %v911 = vrcp.pop %v909
      %v912 = vmul.f32 %v908, %v910
      %v913 = vmul.f32 %v909, %v911
      %v914 = vsub.f32 2.0, %v912
      %v915 = vsub.f32 2.0, %v913
      %v916 = vmul.f32 %v910, %v914
      %v917 = vmul.f32 %v911, %v915
      %v918 = vmul.f32 %v282, %v916
      %v919 = vmul.f32 %v283, %v917
      %v920 = vlaneseq
      %v921 = vshrl.u32 %v920, 7
      %v922 = vsub.s32 1, %v921
      %v923 = vrot.slane %v918, %v922
      %v924 = vlaneseq
      %v925 = vshrl.u32 %v924, 7
      %v926 = vsub.s32 1, %v925
      %v927 = vrot.slane %v919, %v926
      %v928 = vmul.f32 %v923, %v888
      %v929 = vmul.f32 %v927, %v889
      %v930 = vmul.f32 %v923, %v890
      %v931 = vmul.f32 %v927, %v891
      %v932 = vadd.f32 %v880, %v928
      %v933 = vadd.f32 %v881, %v929
      %v934 = vadd.f32 %v882, %v930
      %v935 = vadd.f32 %v883, %v931
      %v936 = vld [vmem:[%s424] sm:$0xff]
      %v937 = vld [vmem:[%s424 + $0x8] sm:$0xff]
      %v938 = vld [vmem:[%s424 + $0x10] sm:$0x1]
      %v939 = vld [vmem:[%s424 + $0x18] sm:$0x1]
      %v940 = vmul.f32 %v936, %v825
      %v941 = vmul.f32 %v937, %v827
      %v942 = vmul.f32 %v938, %v829
      %v943 = vmul.f32 %v939, %v831
      %v944 = vsel %vm290, %v942, 0.0
      %v945 = vadd.f32 %v940, %v944
      %v946 = vrot.slane %v945, 4
      %v947 = vadd.f32 %v945, %v946
      %v948 = vrot.slane %v947, 2
      %v949 = vadd.f32 %v947, %v948
      %v950 = vrot.slane %v949, 1
      %v951 = vadd.f32 %v949, %v950
      %v952 = vsel %vm290, %v943, 0.0
      %v953 = vadd.f32 %v941, %v952
      %v954 = vrot.slane %v953, 4
      %v955 = vadd.f32 %v953, %v954
      %v956 = vrot.slane %v955, 2
      %v957 = vadd.f32 %v955, %v956
      %v958 = vrot.slane %v957, 1
      %v959 = vadd.f32 %v957, %v958
      %v960 = vadd.f32 %v951, 1e-10
      %v961 = vadd.f32 %v959, 1e-10
      %v962 = vrcp.pop %v960
      %v963 = vrcp.pop %v961
      %v964 = vmul.f32 %v960, %v962
      %v965 = vmul.f32 %v961, %v963
      %v966 = vsub.f32 2.0, %v964
      %v967 = vsub.f32 2.0, %v965
      %v968 = vmul.f32 %v962, %v966
      %v969 = vmul.f32 %v963, %v967
      %v970 = vmul.f32 %v282, %v968
      %v971 = vmul.f32 %v283, %v969
      %v972 = vlaneseq
      %v973 = vshrl.u32 %v972, 7
      %v974 = vsub.s32 2, %v973
      %v975 = vrot.slane %v970, %v974
      %v976 = vlaneseq
      %v977 = vshrl.u32 %v976, 7
      %v978 = vsub.s32 2, %v977
      %v979 = vrot.slane %v971, %v978
      %v980 = vmul.f32 %v975, %v940
      %v981 = vmul.f32 %v979, %v941
      %v982 = vmul.f32 %v975, %v942
      %v983 = vmul.f32 %v979, %v943
      %v984 = vadd.f32 %v932, %v980
      %v985 = vadd.f32 %v933, %v981
      %v986 = vadd.f32 %v934, %v982
      %v987 = vadd.f32 %v935, %v983
      %v988 = vld [vmem:[%s477] sm:$0xff]
      %v989 = vld [vmem:[%s477 + $0x8] sm:$0xff]
      %v990 = vld [vmem:[%s477 + $0x10] sm:$0x1]
      %v991 = vld [vmem:[%s477 + $0x18] sm:$0x1]
      %v992 = vmul.f32 %v988, %v825
      %v993 = vmul.f32 %v989, %v827
      %v994 = vmul.f32 %v990, %v829
      %v995 = vmul.f32 %v991, %v831
      %v996 = vsel %vm290, %v994, 0.0
      %v997 = vadd.f32 %v992, %v996
      %v998 = vrot.slane %v997, 4
      %v999 = vadd.f32 %v997, %v998
      %v1000 = vrot.slane %v999, 2
      %v1001 = vadd.f32 %v999, %v1000
      %v1002 = vrot.slane %v1001, 1
      %v1003 = vadd.f32 %v1001, %v1002
      %v1004 = vsel %vm290, %v995, 0.0
      %v1005 = vadd.f32 %v993, %v1004
      %v1006 = vrot.slane %v1005, 4
      %v1007 = vadd.f32 %v1005, %v1006
      %v1008 = vrot.slane %v1007, 2
      %v1009 = vadd.f32 %v1007, %v1008
      %v1010 = vrot.slane %v1009, 1
      %v1011 = vadd.f32 %v1009, %v1010
      %v1012 = vadd.f32 %v1003, 1e-10
      %v1013 = vadd.f32 %v1011, 1e-10
      %v1014 = vrcp.pop %v1012
      %v1015 = vrcp.pop %v1013
      %v1016 = vmul.f32 %v1012, %v1014
      %v1017 = vmul.f32 %v1013, %v1015
      %v1018 = vsub.f32 2.0, %v1016
      %v1019 = vsub.f32 2.0, %v1017
      %v1020 = vmul.f32 %v1014, %v1018
      %v1021 = vmul.f32 %v1015, %v1019
      %v1022 = vmul.f32 %v282, %v1020
      %v1023 = vmul.f32 %v283, %v1021
      %v1024 = vlaneseq
      %v1025 = vshrl.u32 %v1024, 7
      %v1026 = vsub.s32 3, %v1025
      %v1027 = vrot.slane %v1022, %v1026
      %v1028 = vlaneseq
      %v1029 = vshrl.u32 %v1028, 7
      %v1030 = vsub.s32 3, %v1029
      %v1031 = vrot.slane %v1023, %v1030
      %v1032 = vmul.f32 %v1027, %v992
      %v1033 = vmul.f32 %v1031, %v993
      %v1034 = vmul.f32 %v1027, %v994
      %v1035 = vmul.f32 %v1031, %v995
      %v1036 = vadd.f32 %v984, %v1032
      %v1037 = vadd.f32 %v985, %v1033
      %v1038 = vadd.f32 %v986, %v1034
      %v1039 = vadd.f32 %v987, %v1035
      %v1040 = vld [vmem:[%s530] sm:$0xff]
      %v1041 = vld [vmem:[%s530 + $0x8] sm:$0xff]
      %v1042 = vld [vmem:[%s530 + $0x10] sm:$0x1]
      %v1043 = vld [vmem:[%s530 + $0x18] sm:$0x1]
      %v1044 = vmul.f32 %v1040, %v825
      %v1045 = vmul.f32 %v1041, %v827
      %v1046 = vmul.f32 %v1042, %v829
      %v1047 = vmul.f32 %v1043, %v831
      %v1048 = vsel %vm290, %v1046, 0.0
      %v1049 = vadd.f32 %v1044, %v1048
      %v1050 = vrot.slane %v1049, 4
      %v1051 = vadd.f32 %v1049, %v1050
      %v1052 = vrot.slane %v1051, 2
      %v1053 = vadd.f32 %v1051, %v1052
      %v1054 = vrot.slane %v1053, 1
      %v1055 = vadd.f32 %v1053, %v1054
      %v1056 = vsel %vm290, %v1047, 0.0
      %v1057 = vadd.f32 %v1045, %v1056
      %v1058 = vrot.slane %v1057, 4
      %v1059 = vadd.f32 %v1057, %v1058
      %v1060 = vrot.slane %v1059, 2
      %v1061 = vadd.f32 %v1059, %v1060
      %v1062 = vrot.slane %v1061, 1
      %v1063 = vadd.f32 %v1061, %v1062
      %v1064 = vadd.f32 %v1055, 1e-10
      %v1065 = vadd.f32 %v1063, 1e-10
      %v1066 = vrcp.pop %v1064
      %v1067 = vrcp.pop %v1065
      %v1068 = vmul.f32 %v1064, %v1066
      %v1069 = vmul.f32 %v1065, %v1067
      %v1070 = vsub.f32 2.0, %v1068
      %v1071 = vsub.f32 2.0, %v1069
      %v1072 = vmul.f32 %v1066, %v1070
      %v1073 = vmul.f32 %v1067, %v1071
      %v1074 = vmul.f32 %v282, %v1072
      %v1075 = vmul.f32 %v283, %v1073
      %v1076 = vlaneseq
      %v1077 = vshrl.u32 %v1076, 7
      %v1078 = vsub.s32 4, %v1077
      %v1079 = vrot.slane %v1074, %v1078
      %v1080 = vlaneseq
      %v1081 = vshrl.u32 %v1080, 7
      %v1082 = vsub.s32 4, %v1081
      %v1083 = vrot.slane %v1075, %v1082
      %v1084 = vmul.f32 %v1079, %v1044
      %v1085 = vmul.f32 %v1083, %v1045
      %v1086 = vmul.f32 %v1079, %v1046
      %v1087 = vmul.f32 %v1083, %v1047
      %v1088 = vadd.f32 %v1036, %v1084
      %v1089 = vadd.f32 %v1037, %v1085
      %v1090 = vadd.f32 %v1038, %v1086
      %v1091 = vadd.f32 %v1039, %v1087
      %v1092 = vld [vmem:[%s583] sm:$0xff]
      %v1093 = vld [vmem:[%s583 + $0x8] sm:$0xff]
      %v1094 = vld [vmem:[%s583 + $0x10] sm:$0x1]
      %v1095 = vld [vmem:[%s583 + $0x18] sm:$0x1]
      %v1096 = vmul.f32 %v1092, %v825
      %v1097 = vmul.f32 %v1093, %v827
      %v1098 = vmul.f32 %v1094, %v829
      %v1099 = vmul.f32 %v1095, %v831
      %v1100 = vsel %vm290, %v1098, 0.0
      %v1101 = vadd.f32 %v1096, %v1100
      %v1102 = vrot.slane %v1101, 4
      %v1103 = vadd.f32 %v1101, %v1102
      %v1104 = vrot.slane %v1103, 2
      %v1105 = vadd.f32 %v1103, %v1104
      %v1106 = vrot.slane %v1105, 1
      %v1107 = vadd.f32 %v1105, %v1106
      %v1108 = vsel %vm290, %v1099, 0.0
      %v1109 = vadd.f32 %v1097, %v1108
      %v1110 = vrot.slane %v1109, 4
      %v1111 = vadd.f32 %v1109, %v1110
      %v1112 = vrot.slane %v1111, 2
      %v1113 = vadd.f32 %v1111, %v1112
      %v1114 = vrot.slane %v1113, 1
      %v1115 = vadd.f32 %v1113, %v1114
      %v1116 = vadd.f32 %v1107, 1e-10
      %v1117 = vadd.f32 %v1115, 1e-10
      %v1118 = vrcp.pop %v1116
      %v1119 = vrcp.pop %v1117
      %v1120 = vmul.f32 %v1116, %v1118
      %v1121 = vmul.f32 %v1117, %v1119
      %v1122 = vsub.f32 2.0, %v1120
      %v1123 = vsub.f32 2.0, %v1121
      %v1124 = vmul.f32 %v1118, %v1122
      %v1125 = vmul.f32 %v1119, %v1123
      %v1126 = vmul.f32 %v282, %v1124
      %v1127 = vmul.f32 %v283, %v1125
      %v1128 = vlaneseq
      %v1129 = vshrl.u32 %v1128, 7
      %v1130 = vsub.s32 5, %v1129
      %v1131 = vrot.slane %v1126, %v1130
      %v1132 = vlaneseq
      %v1133 = vshrl.u32 %v1132, 7
      %v1134 = vsub.s32 5, %v1133
      %v1135 = vrot.slane %v1127, %v1134
      %v1136 = vmul.f32 %v1131, %v1096
      %v1137 = vmul.f32 %v1135, %v1097
      %v1138 = vmul.f32 %v1131, %v1098
      %v1139 = vmul.f32 %v1135, %v1099
      %v1140 = vadd.f32 %v1088, %v1136
      %v1141 = vadd.f32 %v1089, %v1137
      %v1142 = vadd.f32 %v1090, %v1138
      %v1143 = vadd.f32 %v1091, %v1139
      %v1144 = vld [vmem:[%s636] sm:$0xff]
      %v1145 = vld [vmem:[%s636 + $0x8] sm:$0xff]
      %v1146 = vld [vmem:[%s636 + $0x10] sm:$0x1]
      %v1147 = vld [vmem:[%s636 + $0x18] sm:$0x1]
      %v1148 = vmul.f32 %v1144, %v825
      %v1149 = vmul.f32 %v1145, %v827
      %v1150 = vmul.f32 %v1146, %v829
      %v1151 = vmul.f32 %v1147, %v831
      %v1152 = vsel %vm290, %v1150, 0.0
      %v1153 = vadd.f32 %v1148, %v1152
      %v1154 = vrot.slane %v1153, 4
      %v1155 = vadd.f32 %v1153, %v1154
      %v1156 = vrot.slane %v1155, 2
      %v1157 = vadd.f32 %v1155, %v1156
      %v1158 = vrot.slane %v1157, 1
      %v1159 = vadd.f32 %v1157, %v1158
      %v1160 = vsel %vm290, %v1151, 0.0
      %v1161 = vadd.f32 %v1149, %v1160
      %v1162 = vrot.slane %v1161, 4
      %v1163 = vadd.f32 %v1161, %v1162
      %v1164 = vrot.slane %v1163, 2
      %v1165 = vadd.f32 %v1163, %v1164
      %v1166 = vrot.slane %v1165, 1
      %v1167 = vadd.f32 %v1165, %v1166
      %v1168 = vadd.f32 %v1159, 1e-10
      %v1169 = vadd.f32 %v1167, 1e-10
      %v1170 = vrcp.pop %v1168
      %v1171 = vrcp.pop %v1169
      %v1172 = vmul.f32 %v1168, %v1170
      %v1173 = vmul.f32 %v1169, %v1171
      %v1174 = vsub.f32 2.0, %v1172
      %v1175 = vsub.f32 2.0, %v1173
      %v1176 = vmul.f32 %v1170, %v1174
      %v1177 = vmul.f32 %v1171, %v1175
      %v1178 = vmul.f32 %v282, %v1176
      %v1179 = vmul.f32 %v283, %v1177
      %v1180 = vlaneseq
      %v1181 = vshrl.u32 %v1180, 7
      %v1182 = vsub.s32 6, %v1181
      %v1183 = vrot.slane %v1178, %v1182
      %v1184 = vlaneseq
      %v1185 = vshrl.u32 %v1184, 7
      %v1186 = vsub.s32 6, %v1185
      %v1187 = vrot.slane %v1179, %v1186
      %v1188 = vmul.f32 %v1183, %v1148
      %v1189 = vmul.f32 %v1187, %v1149
      %v1190 = vmul.f32 %v1183, %v1150
      %v1191 = vmul.f32 %v1187, %v1151
      %v1192 = vadd.f32 %v1140, %v1188
      %v1193 = vadd.f32 %v1141, %v1189
      %v1194 = vadd.f32 %v1142, %v1190
      %v1195 = vadd.f32 %v1143, %v1191
      %v1196 = vld [vmem:[%s689] sm:$0xff]
      %v1197 = vld [vmem:[%s689 + $0x8] sm:$0xff]
      %v1198 = vld [vmem:[%s689 + $0x10] sm:$0x1]
      %v1199 = vld [vmem:[%s689 + $0x18] sm:$0x1]
      %v1200 = vmul.f32 %v1196, %v825
      %v1201 = vmul.f32 %v1197, %v827
      %v1202 = vmul.f32 %v1198, %v829
      %v1203 = vmul.f32 %v1199, %v831
      %v1204 = vsel %vm290, %v1202, 0.0
      %v1205 = vadd.f32 %v1200, %v1204
      %v1206 = vrot.slane %v1205, 4
      %v1207 = vadd.f32 %v1205, %v1206
      %v1208 = vrot.slane %v1207, 2
      %v1209 = vadd.f32 %v1207, %v1208
      %v1210 = vrot.slane %v1209, 1
      %v1211 = vadd.f32 %v1209, %v1210
      %v1212 = vsel %vm290, %v1203, 0.0
      %v1213 = vadd.f32 %v1201, %v1212
      %v1214 = vrot.slane %v1213, 4
      %v1215 = vadd.f32 %v1213, %v1214
      %v1216 = vrot.slane %v1215, 2
      %v1217 = vadd.f32 %v1215, %v1216
      %v1218 = vrot.slane %v1217, 1
      %v1219 = vadd.f32 %v1217, %v1218
      %v1220 = vadd.f32 %v1211, 1e-10
      %v1221 = vadd.f32 %v1219, 1e-10
      %v1222 = vrcp.pop %v1220
      %v1223 = vrcp.pop %v1221
      %v1224 = vmul.f32 %v1220, %v1222
      %v1225 = vmul.f32 %v1221, %v1223
      %v1226 = vsub.f32 2.0, %v1224
      %v1227 = vsub.f32 2.0, %v1225
      %v1228 = vmul.f32 %v1222, %v1226
      %v1229 = vmul.f32 %v1223, %v1227
      %v1230 = vmul.f32 %v282, %v1228
      %v1231 = vmul.f32 %v283, %v1229
      %v1232 = vlaneseq
      %v1233 = vshrl.u32 %v1232, 7
      %v1234 = vsub.s32 7, %v1233
      %v1235 = vrot.slane %v1230, %v1234
      %v1236 = vlaneseq
      %v1237 = vshrl.u32 %v1236, 7
      %v1238 = vsub.s32 7, %v1237
      %v1239 = vrot.slane %v1231, %v1238
      %v1240 = vmul.f32 %v1235, %v1200
      %v1241 = vmul.f32 %v1239, %v1201
      %v1242 = vmul.f32 %v1235, %v1202
      %v1243 = vmul.f32 %v1239, %v1203
      %v1244 = vadd.f32 %v1192, %v1240
      %v1245 = vadd.f32 %v1193, %v1241
      %v1246 = vadd.f32 %v1194, %v1242
      %v1247 = vadd.f32 %v1195, %v1243
      %v1248 = vld [vmem:[%s742] sm:$0xff]
      %v1249 = vld [vmem:[%s742 + $0x8] sm:$0xff]
      %v1250 = vld [vmem:[%s742 + $0x10] sm:$0x1]
      %v1251 = vld [vmem:[%s742 + $0x18] sm:$0x1]
      %v1252 = vmul.f32 %v1248, %v825
      %v1253 = vmul.f32 %v1249, %v827
      %v1254 = vmul.f32 %v1250, %v829
      %v1255 = vmul.f32 %v1251, %v831
      %v1256 = vsel %vm290, %v1254, 0.0
      %v1257 = vadd.f32 %v1252, %v1256
      %v1258 = vrot.slane %v1257, 4
      %v1259 = vadd.f32 %v1257, %v1258
      %v1260 = vrot.slane %v1259, 2
      %v1261 = vadd.f32 %v1259, %v1260
      %v1262 = vrot.slane %v1261, 1
      %v1263 = vadd.f32 %v1261, %v1262
      %v1264 = vsel %vm290, %v1255, 0.0
      %v1265 = vadd.f32 %v1253, %v1264
      %v1266 = vrot.slane %v1265, 4
      %v1267 = vadd.f32 %v1265, %v1266
      %v1268 = vrot.slane %v1267, 2
      %v1269 = vadd.f32 %v1267, %v1268
      %v1270 = vrot.slane %v1269, 1
      %v1271 = vadd.f32 %v1269, %v1270
      %v1272 = vadd.f32 %v1263, 1e-10
      %v1273 = vadd.f32 %v1271, 1e-10
      %v1274 = vrcp.pop %v1272
      %v1275 = vrcp.pop %v1273
      %v1276 = vmul.f32 %v1272, %v1274
      %v1277 = vmul.f32 %v1273, %v1275
      %v1278 = vsub.f32 2.0, %v1276
      %v1279 = vsub.f32 2.0, %v1277
      %v1280 = vmul.f32 %v1274, %v1278
      %v1281 = vmul.f32 %v1275, %v1279
      %v1282 = vmul.f32 %v284, %v1280
      %v1283 = vmul.f32 %v285, %v1281
      %v1284 = vlaneseq
      %v1285 = vshrl.u32 %v1284, 7
      %v1286 = vsub.s32 0, %v1285
      %v1287 = vrot.slane %v1282, %v1286
      %v1288 = vlaneseq
      %v1289 = vshrl.u32 %v1288, 7
      %v1290 = vsub.s32 0, %v1289
      %v1291 = vrot.slane %v1283, %v1290
      %v1292 = vmul.f32 %v1287, %v1252
      %v1293 = vmul.f32 %v1291, %v1253
      %v1294 = vmul.f32 %v1287, %v1254
      %v1295 = vmul.f32 %v1291, %v1255
      %v1296 = vadd.f32 %v1244, %v1292
      %v1297 = vadd.f32 %v1245, %v1293
      %v1298 = vadd.f32 %v1246, %v1294
      %v1299 = vadd.f32 %v1247, %v1295
      %s1300 = scalar_lea.vmem %s280, 32
      %1301 = vst [vmem:[%s1300] sm:$0xff] %v1296
      %1302 = vst [vmem:[%s1300 + $0x8] sm:$0xff] %v1297
      %1303 = vst [vmem:[%s1300 + $0x10] sm:$0x1] %v1298
      %1304 = vst [vmem:[%s1300 + $0x18] sm:$0x1] %v1299
      %s1305 = smul.u32 2, %s19
      %p1306 = scmp.lt.s32.totalorder %s18, 1
      %s1307 = scalar_select %p1306, %s18, 1
      %p1308 = scmp.lt.s32.totalorder %s1305, 1
      %s1309 = scalar_select %p1308, %s1305, 1
      %s1310 = smul.addr %s1307, 8
      %s1311 = sadd.s32 %s1309, %s1310
      %s1312 = smul.addr %s1311, 8
      %s1313 = scalar_lea.vmem %s3, %s1312
      // Predicated region
      $region33: #{tpu_custom_call.1} parent=31 // pred_check
        %p1314 = pneg %p130
      $region34: #{tpu_custom_call.1} parent=31 // pred_check_branch
        %1316 = sbr.rel (%p1314) target = $region36
      $region35: #{tpu_custom_call.1} parent=31 // pred_region
        %s1317 = smul.u32 2, %s19
      $region36: #{tpu_custom_call.1} parent=31 // pred_fallthru
        _
    $region32: #{tpu_custom_call.1} parent=5 // pred_fallthru
      _
    %p1318 = scmp.le.s32.totalorder 2, %s9
    // Predicated region
    $region37: #{tpu_custom_call.1} parent=5 // pred_check
      %p1319 = pneg %p1318
    $region38: #{tpu_custom_call.1} parent=5 // pred_check_branch
      %1321 = sbr.rel (%p1319) target = $region40
    $region39: #{tpu_custom_call.1} parent=5 // pred_region
      %s1322 = ssub.s32 %s9, 2
      // Predicated region
      $region41: #{tpu_custom_call.1} parent=39 // pred_check
        %p1323 = pneg %p136
      $region42: #{tpu_custom_call.1} parent=39 // pred_check_branch
        %1325 = sbr.rel (%p1323) target = $region44
      $region43: #{tpu_custom_call.1} parent=39 // pred_region
        %s1326 = smul.u32 2, %s21
        %p1327 = scmp.lt.s32.totalorder %s20, 1
        %s1328 = scalar_select %p1327, %s20, 1
        %p1329 = scmp.lt.s32.totalorder %s1326, 1
        %s1330 = scalar_select %p1329, %s1326, 1
        %s1331 = smul.addr %s1328, 8
        %s1332 = sadd.s32 %s1330, %s1331
        %s1333 = smul.addr %s1332, 8
        %s1334 = scalar_lea.vmem %s3, %s1333
      $region44: #{tpu_custom_call.1} parent=39 // pred_fallthru
        _
    $region40: #{tpu_custom_call.1} parent=5 // pred_fallthru
      _
  $region6: #{tpu_custom_call.1} parent=0 // loop_footer
    %s13 = sadd.s32 1, %s9
  $region7: #{tpu_custom_call.1} parent=0 // loop_footer_branch
    %8 = sbr.rel target = $region3
  $region8: #{tpu_custom_call.1} parent=0 // loop_exit
    _

</llo_original>
